<compile_context>
chip_gen: v7x
topology: tpu7x:2x2x1
jax: 0.10.0
libtpu: 0.0.40
codegen_flags: <defaults>
</compile_context>

<pallas_src>
import jax
import jax.numpy as jnp
from jax import lax
from jax.experimental import pallas as pl
from jax.experimental.pallas import tpu as pltpu


def _down_kernel(x_ref, w1_ref, s1_ref, b1_ref, w2_ref, s2_ref, b2_ref,
                 o_ref, cat1_ref, cat2_ref, acc1_ref, acc2_ref):
    # x_ref:    (4, Hp, Wp, Cin)       -- 2x2 pool window folded onto the leading axis
    # w*_ref:   (3, 3*Cin, Cout) bf16  -- conv weights indexed (dy, dx*Cin + ci, co)
    # s*/b*:    (1, C) f32             -- folded BatchNorm scale / shift
    # cat*_ref: (Hp+2, Wp, 3*C) f32    -- zero-padded, dx-concatenated conv operand
    # acc*_ref: (Hp*Wp, C) f32         -- matmul accumulators
    # o_ref:    (Hp*Wp, Cout)
    _, Hp, Wp, Cin = x_ref.shape
    Cmid = acc1_ref.shape[-1]

    # --- MaxPool2d(kernel=2, stride=2): max over the folded 2x2 window axis ---
    pooled = jnp.maximum(jnp.maximum(x_ref[0], x_ref[1]),
                         jnp.maximum(x_ref[2], x_ref[3]))      # (Hp, Wp, Cin)

    def conv3x3_bn_relu(inp, cin, cat_ref, acc_ref, w_ref, s_ref, b_ref):
        # Build the padded, dx-concatenated operand:
        #   cat[r, w, dx*cin:(dx+1)*cin] = zeropad(inp)[r, w + dx, :]
        # The data region is fully overwritten each call; only the padding border
        # (never touched by the data stores) is re-zeroed.
        zrow = jnp.zeros((1, Wp, 3 * cin), cat_ref.dtype)
        zcol = jnp.zeros((Hp + 2, 1, cin), cat_ref.dtype)
        cat_ref[0:1, :, :] = zrow                                        # top halo row
        cat_ref[Hp + 1:Hp + 2, :, :] = zrow                              # bottom halo row
        cat_ref[:, 0:1, 0:cin] = zcol                                    # left halo (dx=0)
        cat_ref[:, Wp - 1:Wp, 2 * cin:3 * cin] = zcol                    # right halo (dx=2)
        cat_ref[1:Hp + 1, :, cin:2 * cin] = inp                          # dx = 1
        cat_ref[1:Hp + 1, 1:Wp, 0:cin] = inp[:, 0:Wp - 1, :]             # dx = 0
        cat_ref[1:Hp + 1, 0:Wp - 1, 2 * cin:3 * cin] = inp[:, 1:Wp, :]   # dx = 2

        # 3x3 conv = 3 MXU matmuls (one per dy) with fused K = 3*cin;
        # bf16 operands, f32 accumulation into a VMEM scratch.
        for dy in range(3):
            win = cat_ref[dy:dy + Hp].reshape(Hp * Wp, 3 * cin).astype(jnp.bfloat16)
            part = jnp.dot(win, w_ref[dy], preferred_element_type=jnp.float32)
            if dy == 0:
                acc_ref[...] = part
            else:
                acc_ref[...] += part

        # folded BatchNorm (inference) + ReLU
        return jnp.maximum(acc_ref[...] * s_ref[...] + b_ref[...], 0.0)

    h = conv3x3_bn_relu(pooled, Cin, cat1_ref, acc1_ref, w1_ref, s1_ref, b1_ref)
    out = conv3x3_bn_relu(h.reshape(Hp, Wp, Cmid), Cmid, cat2_ref, acc2_ref,
                          w2_ref, s2_ref, b2_ref)
    o_ref[...] = out.astype(o_ref.dtype)


def down_forward(x_nchw, params):
    """Down.forward. Input/output in NCHW (PyTorch convention)."""
    w1, s1, b1, w2, s2, b2 = params
    N, C, H, W = x_nchw.shape
    assert H % 2 == 0 and W % 2 == 0, "Down expects even H, W for MaxPool2d(2)"
    Hp, Wp = H // 2, W // 2
    Cmid = w1.shape[-1]
    Cout = w2.shape[-1]

    # NCHW -> NHWC, then fold the 2x2 pool window onto a leading size-4 axis so the
    # kernel's input block keeps dense (W, C) trailing dims.
    x = jnp.transpose(x_nchw, (0, 2, 3, 1))
    x = x.reshape(N, Hp, 2, Wp, 2, C)
    x = jnp.transpose(x, (0, 2, 4, 1, 3, 5)).reshape(N, 4, Hp, Wp, C)

    # Conv weights: HWIO (3,3,Cin,Cout) -> (3, 3*Cin, Cout) with (dx, ci) fused into
    # the contraction dim; bf16 for native MXU rate (f32 accumulation in-kernel).
    w1_r = w1.reshape(3, 3 * C, Cmid).astype(jnp.bfloat16)
    w2_r = w2.reshape(3, 3 * Cmid, Cout).astype(jnp.bfloat16)

    out_flat = pl.pallas_call(
        _down_kernel,
        out_shape=jax.ShapeDtypeStruct((N, Hp * Wp, Cout), x_nchw.dtype),
        grid_spec=pltpu.PrefetchScalarGridSpec(
            num_scalar_prefetch=0,
            grid=(N,),
            in_specs=[
                pl.BlockSpec((None, 4, Hp, Wp, C), lambda n: (n, 0, 0, 0, 0)),
                pl.BlockSpec((3, 3 * C, Cmid), lambda n: (0, 0, 0)),
                pl.BlockSpec((1, Cmid), lambda n: (0, 0)),
                pl.BlockSpec((1, Cmid), lambda n: (0, 0)),
                pl.BlockSpec((3, 3 * Cmid, Cout), lambda n: (0, 0, 0)),
                pl.BlockSpec((1, Cout), lambda n: (0, 0)),
                pl.BlockSpec((1, Cout), lambda n: (0, 0)),
            ],
            out_specs=pl.BlockSpec((None, Hp * Wp, Cout), lambda n: (n, 0, 0)),
            scratch_shapes=[
                pltpu.VMEM((Hp + 2, Wp, 3 * C), jnp.float32),
                pltpu.VMEM((Hp + 2, Wp, 3 * Cmid), jnp.float32),
                pltpu.VMEM((Hp * Wp, Cmid), jnp.float32),
                pltpu.VMEM((Hp * Wp, Cout), jnp.float32),
            ],
        ),
        compiler_params=pltpu.CompilerParams(
            dimension_semantics=("parallel",),
            vmem_limit_bytes=48 * 1024 * 1024),
    )(x, w1_r, s1, b1, w2_r, s2, b2)

    out = out_flat.reshape(N, Hp, Wp, Cout)
    return jnp.transpose(out, (0, 3, 1, 2))   # back to NCHW


def init_params(key, in_channels, out_channels, mid_channels=None):
    """Deterministic synthetic parameters matching the PyTorch module's shapes."""
    if mid_channels is None:
        mid_channels = out_channels
    ks = jax.random.split(key, 10)
    eps = 1e-5
    # Conv weights generated in PyTorch OIHW shape, converted to HWIO for NHWC kernel.
    w1_oihw = 0.1 * jax.random.normal(ks[0], (mid_channels, in_channels, 3, 3), jnp.float32)
    w2_oihw = 0.1 * jax.random.normal(ks[1], (out_channels, mid_channels, 3, 3), jnp.float32)
    w1 = jnp.transpose(w1_oihw, (2, 3, 1, 0))
    w2 = jnp.transpose(w2_oihw, (2, 3, 1, 0))
    # BatchNorm2d: gamma, beta, running_mean, running_var (inference), folded to affine.
    g1 = 1.0 + 0.1 * jax.random.normal(ks[2], (mid_channels,), jnp.float32)
    be1 = 0.1 * jax.random.normal(ks[3], (mid_channels,), jnp.float32)
    m1 = 0.1 * jax.random.normal(ks[4], (mid_channels,), jnp.float32)
    v1 = jax.random.uniform(ks[5], (mid_channels,), jnp.float32, 0.5, 1.5)
    g2 = 1.0 + 0.1 * jax.random.normal(ks[6], (out_channels,), jnp.float32)
    be2 = 0.1 * jax.random.normal(ks[7], (out_channels,), jnp.float32)
    m2 = 0.1 * jax.random.normal(ks[8], (out_channels,), jnp.float32)
    v2 = jax.random.uniform(ks[9], (out_channels,), jnp.float32, 0.5, 1.5)
    s1 = (g1 / jnp.sqrt(v1 + eps)).reshape(1, -1)
    b1 = (be1 - m1 * g1 / jnp.sqrt(v1 + eps)).reshape(1, -1)
    s2 = (g2 / jnp.sqrt(v2 + eps)).reshape(1, -1)
    b2 = (be2 - m2 * g2 / jnp.sqrt(v2 + eps)).reshape(1, -1)
    return (w1, s1, b1, w2, s2, b2)


def down_reference(x_nchw, params):
    """Pure-JAX f32 reference (maxpool + conv + folded BN + ReLU) for verification."""
    w1, s1, b1, w2, s2, b2 = params
    x = jnp.transpose(x_nchw, (0, 2, 3, 1))
    pooled = lax.reduce_window(x, -jnp.inf, lax.max,
                               (1, 2, 2, 1), (1, 2, 2, 1), "VALID")
    dn = ("NHWC", "HWIO", "NHWC")
    h = lax.conv_general_dilated(pooled, w1, (1, 1), "SAME",
                                 dimension_numbers=dn,
                                 precision=lax.Precision.HIGHEST)
    h = jnp.maximum(h * s1.reshape(1, 1, 1, -1) + b1.reshape(1, 1, 1, -1), 0.0)
    o = lax.conv_general_dilated(h, w2, (1, 1), "SAME",
                                 dimension_numbers=dn,
                                 precision=lax.Precision.HIGHEST)
    o = jnp.maximum(o * s2.reshape(1, 1, 1, -1) + b2.reshape(1, 1, 1, -1), 0.0)
    return jnp.transpose(o, (0, 3, 1, 2))


if __name__ == "__main__":
    key = jax.random.PRNGKey(0)
    kx, kp = jax.random.split(key)
    N, Cin, H, W = 2, 4, 16, 16
    Cout = 8

    x = jax.random.normal(kx, (N, Cin, H, W), jnp.float32)
    params = init_params(kp, Cin, Cout)

    out = down_forward(x, params)
    out = jax.block_until_ready(out)

    assert out.shape == (N, Cout, H // 2, W // 2), out.shape

    ref = down_reference(x, params)
    max_err = jnp.max(jnp.abs(out - ref))
    # bf16 MXU operands (f32 accumulation) vs. the f32 HIGHEST reference.
    assert jnp.allclose(out, ref, atol=3e-2, rtol=3e-2), f"max abs err {max_err}"

    print("KERNEL_OK")
</pallas_src>

<mosaic_0001>
module attributes {stable_mosaic.version = 11 : i64} {
  func.func @_down_kernel(%arg0: i32, %arg1: memref<1x4x8x8x4xf32, #tpu.memory_space<vmem>>, %arg2: memref<3x12x8xbf16, #tpu.memory_space<vmem>>, %arg3: memref<1x8xf32, #tpu.memory_space<vmem>>, %arg4: memref<1x8xf32, #tpu.memory_space<vmem>>, %arg5: memref<3x24x8xbf16, #tpu.memory_space<vmem>>, %arg6: memref<1x8xf32, #tpu.memory_space<vmem>>, %arg7: memref<1x8xf32, #tpu.memory_space<vmem>>, %arg8: memref<1x64x8xf32, #tpu.memory_space<vmem>>, %arg9: memref<10x8x12xf32, #tpu.memory_space<vmem>>, %arg10: memref<10x8x24xf32, #tpu.memory_space<vmem>>, %arg11: memref<64x8xf32, #tpu.memory_space<vmem>>, %arg12: memref<64x8xf32, #tpu.memory_space<vmem>>) attributes {dimension_semantics = [#tpu.dimension_semantics<parallel>], iteration_bounds = array<i64: 2>, scalar_prefetch = 0 : i64, scratch_operands = 4 : i64, tpu.core_type = #tpu.core_type<tc>, window_params = [{transform_indices = @transform_0, window_bounds = array<i64: 1, 4, 8, 8, 4>}, {pipeline_mode = #tpu.pipeline_mode<synchronous>, transform_indices = @transform_1, window_bounds = array<i64: 3, 12, 8>}, {pipeline_mode = #tpu.pipeline_mode<synchronous>, transform_indices = @transform_2, window_bounds = array<i64: 1, 8>}, {pipeline_mode = #tpu.pipeline_mode<synchronous>, transform_indices = @transform_3, window_bounds = array<i64: 1, 8>}, {pipeline_mode = #tpu.pipeline_mode<synchronous>, transform_indices = @transform_4, window_bounds = array<i64: 3, 24, 8>}, {pipeline_mode = #tpu.pipeline_mode<synchronous>, transform_indices = @transform_5, window_bounds = array<i64: 1, 8>}, {pipeline_mode = #tpu.pipeline_mode<synchronous>, transform_indices = @transform_6, window_bounds = array<i64: 1, 8>}, {transform_indices = @transform_7, window_bounds = array<i64: 1, 64, 8>}]} {
    %c0 = arith.constant 0 : index
    %c0_0 = arith.constant 0 : index
    %c0_1 = arith.constant 0 : index
    %c0_2 = arith.constant 0 : index
    %c0_3 = arith.constant 0 : index
    %0 = vector.load %arg1[%c0, %c0_0, %c0_1, %c0_2, %c0_3] : memref<1x4x8x8x4xf32, #tpu.memory_space<vmem>>, vector<1x1x8x8x4xf32>
    %1 = vector.shape_cast %0 : vector<1x1x8x8x4xf32> to vector<8x8x4xf32>
    %c0_4 = arith.constant 0 : index
    %c1 = arith.constant 1 : index
    %c0_5 = arith.constant 0 : index
    %c0_6 = arith.constant 0 : index
    %c0_7 = arith.constant 0 : index
    %2 = vector.load %arg1[%c0_4, %c1, %c0_5, %c0_6, %c0_7] : memref<1x4x8x8x4xf32, #tpu.memory_space<vmem>>, vector<1x1x8x8x4xf32>
    %3 = vector.shape_cast %2 : vector<1x1x8x8x4xf32> to vector<8x8x4xf32>
    %4 = arith.maximumf %1, %3 : vector<8x8x4xf32>
    %c0_8 = arith.constant 0 : index
    %c2 = arith.constant 2 : index
    %c0_9 = arith.constant 0 : index
    %c0_10 = arith.constant 0 : index
    %c0_11 = arith.constant 0 : index
    %5 = vector.load %arg1[%c0_8, %c2, %c0_9, %c0_10, %c0_11] : memref<1x4x8x8x4xf32, #tpu.memory_space<vmem>>, vector<1x1x8x8x4xf32>
    %6 = vector.shape_cast %5 : vector<1x1x8x8x4xf32> to vector<8x8x4xf32>
    %c0_12 = arith.constant 0 : index
    %c3 = arith.constant 3 : index
    %c0_13 = arith.constant 0 : index
    %c0_14 = arith.constant 0 : index
    %c0_15 = arith.constant 0 : index
    %7 = vector.load %arg1[%c0_12, %c3, %c0_13, %c0_14, %c0_15] : memref<1x4x8x8x4xf32, #tpu.memory_space<vmem>>, vector<1x1x8x8x4xf32>
    %8 = vector.shape_cast %7 : vector<1x1x8x8x4xf32> to vector<8x8x4xf32>
    %9 = arith.maximumf %6, %8 : vector<8x8x4xf32>
    %10 = arith.maximumf %4, %9 : vector<8x8x4xf32>
    %cst = arith.constant 0.000000e+00 : f32
    %11 = vector.broadcast %cst : f32 to vector<1x8x12xf32>
    %cst_16 = arith.constant 0.000000e+00 : f32
    %12 = vector.broadcast %cst_16 : f32 to vector<10x1x4xf32>
    %c0_17 = arith.constant 0 : index
    %c0_18 = arith.constant 0 : index
    %c0_19 = arith.constant 0 : index
    %13 = vector.load %arg9[%c0_17, %c0_18, %c0_19] : memref<10x8x12xf32, #tpu.memory_space<vmem>>, vector<1x8x12xf32>
    tpu.vector_store %arg9[%c0_17, %c0_18, %c0_19], %11 {strides = array<i32>} : memref<10x8x12xf32, #tpu.memory_space<vmem>>, vector<1x8x12xf32>,
    %c9 = arith.constant 9 : index
    %c0_20 = arith.constant 0 : index
    %c0_21 = arith.constant 0 : index
    %14 = vector.load %arg9[%c9, %c0_20, %c0_21] : memref<10x8x12xf32, #tpu.memory_space<vmem>>, vector<1x8x12xf32>
    tpu.vector_store %arg9[%c9, %c0_20, %c0_21], %11 {strides = array<i32>} : memref<10x8x12xf32, #tpu.memory_space<vmem>>, vector<1x8x12xf32>,
    %c0_22 = arith.constant 0 : index
    %c0_23 = arith.constant 0 : index
    %c0_24 = arith.constant 0 : index
    %15 = vector.load %arg9[%c0_22, %c0_23, %c0_24] : memref<10x8x12xf32, #tpu.memory_space<vmem>>, vector<10x1x4xf32>
    tpu.vector_store %arg9[%c0_22, %c0_23, %c0_24], %12 {strides = array<i32>} : memref<10x8x12xf32, #tpu.memory_space<vmem>>, vector<10x1x4xf32>,
    %c0_25 = arith.constant 0 : index
    %c7 = arith.constant 7 : index
    %c8 = arith.constant 8 : index
    %16 = vector.load %arg9[%c0_25, %c7, %c8] : memref<10x8x12xf32, #tpu.memory_space<vmem>>, vector<10x1x4xf32>
    tpu.vector_store %arg9[%c0_25, %c7, %c8], %12 {strides = array<i32>} : memref<10x8x12xf32, #tpu.memory_space<vmem>>, vector<10x1x4xf32>,
    %c1_26 = arith.constant 1 : index
    %c0_27 = arith.constant 0 : index
    %c4 = arith.constant 4 : index
    %17 = vector.load %arg9[%c1_26, %c0_27, %c4] : memref<10x8x12xf32, #tpu.memory_space<vmem>>, vector<8x8x4xf32>
    tpu.vector_store %arg9[%c1_26, %c0_27, %c4], %10 {strides = array<i32>} : memref<10x8x12xf32, #tpu.memory_space<vmem>>, vector<8x8x4xf32>,
    %18 = vector.extract_strided_slice %10 {offsets = [0, 0, 0], sizes = [8, 7, 4], strides = [1, 1, 1]} : vector<8x8x4xf32> to vector<8x7x4xf32>
    %c1_28 = arith.constant 1 : index
    %c1_29 = arith.constant 1 : index
    %c0_30 = arith.constant 0 : index
    %19 = vector.load %arg9[%c1_28, %c1_29, %c0_30] : memref<10x8x12xf32, #tpu.memory_space<vmem>>, vector<8x7x4xf32>
    tpu.vector_store %arg9[%c1_28, %c1_29, %c0_30], %18 {strides = array<i32>} : memref<10x8x12xf32, #tpu.memory_space<vmem>>, vector<8x7x4xf32>,
    %20 = vector.extract_strided_slice %10 {offsets = [0, 1, 0], sizes = [8, 7, 4], strides = [1, 1, 1]} : vector<8x8x4xf32> to vector<8x7x4xf32>
    %c1_31 = arith.constant 1 : index
    %c0_32 = arith.constant 0 : index
    %c8_33 = arith.constant 8 : index
    %21 = vector.load %arg9[%c1_31, %c0_32, %c8_33] : memref<10x8x12xf32, #tpu.memory_space<vmem>>, vector<8x7x4xf32>
    tpu.vector_store %arg9[%c1_31, %c0_32, %c8_33], %20 {strides = array<i32>} : memref<10x8x12xf32, #tpu.memory_space<vmem>>, vector<8x7x4xf32>,
    %c0_34 = arith.constant 0 : index
    %c0_35 = arith.constant 0 : index
    %c0_36 = arith.constant 0 : index
    %22 = vector.load %arg9[%c0_34, %c0_35, %c0_36] : memref<10x8x12xf32, #tpu.memory_space<vmem>>, vector<8x8x12xf32>
    %23 = vector.shape_cast %22 : vector<8x8x12xf32> to vector<64x12xf32>
    %24 = arith.truncf %23 : vector<64x12xf32> to vector<64x12xbf16>
    %c0_37 = arith.constant 0 : index
    %c0_38 = arith.constant 0 : index
    %c0_39 = arith.constant 0 : index
    %25 = vector.load %arg2[%c0_37, %c0_38, %c0_39] : memref<3x12x8xbf16, #tpu.memory_space<vmem>>, vector<1x12x8xbf16>
    %26 = vector.shape_cast %25 : vector<1x12x8xbf16> to vector<12x8xbf16>
    %cst_40 = arith.constant dense<0.000000e+00> : vector<64x8xf32>
    %27 = tpu.matmul %24, %26, %cst_40 {dimension_numbers = #tpu.dot_dimension_numbers<[1], [0], [0], [1], [0, 0, 1, 1], [], []>} : vector<64x12xbf16>, vector<12x8xbf16>, vector<64x8xf32> -> vector<64x8xf32>
    %c0_41 = arith.constant 0 : index
    %c0_42 = arith.constant 0 : index
    %28 = vector.load %arg11[%c0_41, %c0_42] : memref<64x8xf32, #tpu.memory_space<vmem>>, vector<64x8xf32>
    tpu.vector_store %arg11[%c0_41, %c0_42], %27 {strides = array<i32>} : memref<64x8xf32, #tpu.memory_space<vmem>>, vector<64x8xf32>,
    %c1_43 = arith.constant 1 : index
    %c0_44 = arith.constant 0 : index
    %c0_45 = arith.constant 0 : index
    %29 = vector.load %arg9[%c1_43, %c0_44, %c0_45] : memref<10x8x12xf32, #tpu.memory_space<vmem>>, vector<8x8x12xf32>
    %30 = vector.shape_cast %29 : vector<8x8x12xf32> to vector<64x12xf32>
    %31 = arith.truncf %30 : vector<64x12xf32> to vector<64x12xbf16>
    %c1_46 = arith.constant 1 : index
    %c0_47 = arith.constant 0 : index
    %c0_48 = arith.constant 0 : index
    %32 = vector.load %arg2[%c1_46, %c0_47, %c0_48] : memref<3x12x8xbf16, #tpu.memory_space<vmem>>, vector<1x12x8xbf16>
    %33 = vector.shape_cast %32 : vector<1x12x8xbf16> to vector<12x8xbf16>
    %cst_49 = arith.constant dense<0.000000e+00> : vector<64x8xf32>
    %34 = tpu.matmul %31, %33, %cst_49 {dimension_numbers = #tpu.dot_dimension_numbers<[1], [0], [0], [1], [0, 0, 1, 1], [], []>} : vector<64x12xbf16>, vector<12x8xbf16>, vector<64x8xf32> -> vector<64x8xf32>
    %c0_50 = arith.constant 0 : index
    %c0_51 = arith.constant 0 : index
    %35 = vector.load %arg11[%c0_50, %c0_51] : memref<64x8xf32, #tpu.memory_space<vmem>>, vector<64x8xf32>
    %36 = arith.addf %35, %34 : vector<64x8xf32>
    %c0_52 = arith.constant 0 : index
    %c0_53 = arith.constant 0 : index
    %37 = vector.load %arg11[%c0_52, %c0_53] : memref<64x8xf32, #tpu.memory_space<vmem>>, vector<64x8xf32>
    tpu.vector_store %arg11[%c0_52, %c0_53], %36 {strides = array<i32>} : memref<64x8xf32, #tpu.memory_space<vmem>>, vector<64x8xf32>,
    %c2_54 = arith.constant 2 : index
    %c0_55 = arith.constant 0 : index
    %c0_56 = arith.constant 0 : index
    %38 = vector.load %arg9[%c2_54, %c0_55, %c0_56] : memref<10x8x12xf32, #tpu.memory_space<vmem>>, vector<8x8x12xf32>
    %39 = vector.shape_cast %38 : vector<8x8x12xf32> to vector<64x12xf32>
    %40 = arith.truncf %39 : vector<64x12xf32> to vector<64x12xbf16>
    %c2_57 = arith.constant 2 : index
    %c0_58 = arith.constant 0 : index
    %c0_59 = arith.constant 0 : index
    %41 = vector.load %arg2[%c2_57, %c0_58, %c0_59] : memref<3x12x8xbf16, #tpu.memory_space<vmem>>, vector<1x12x8xbf16>
    %42 = vector.shape_cast %41 : vector<1x12x8xbf16> to vector<12x8xbf16>
    %cst_60 = arith.constant dense<0.000000e+00> : vector<64x8xf32>
    %43 = tpu.matmul %40, %42, %cst_60 {dimension_numbers = #tpu.dot_dimension_numbers<[1], [0], [0], [1], [0, 0, 1, 1], [], []>} : vector<64x12xbf16>, vector<12x8xbf16>, vector<64x8xf32> -> vector<64x8xf32>
    %c0_61 = arith.constant 0 : index
    %c0_62 = arith.constant 0 : index
    %44 = vector.load %arg11[%c0_61, %c0_62] : memref<64x8xf32, #tpu.memory_space<vmem>>, vector<64x8xf32>
    %45 = arith.addf %44, %43 : vector<64x8xf32>
    %c0_63 = arith.constant 0 : index
    %c0_64 = arith.constant 0 : index
    %46 = vector.load %arg11[%c0_63, %c0_64] : memref<64x8xf32, #tpu.memory_space<vmem>>, vector<64x8xf32>
    tpu.vector_store %arg11[%c0_63, %c0_64], %45 {strides = array<i32>} : memref<64x8xf32, #tpu.memory_space<vmem>>, vector<64x8xf32>,
    %c0_65 = arith.constant 0 : index
    %c0_66 = arith.constant 0 : index
    %47 = vector.load %arg11[%c0_65, %c0_66] : memref<64x8xf32, #tpu.memory_space<vmem>>, vector<64x8xf32>
    %c0_67 = arith.constant 0 : index
    %c0_68 = arith.constant 0 : index
    %48 = vector.load %arg3[%c0_67, %c0_68] : memref<1x8xf32, #tpu.memory_space<vmem>>, vector<1x8xf32>
    %49 = vector.broadcast %48 : vector<1x8xf32> to vector<64x8xf32>
    %50 = arith.mulf %47, %49 : vector<64x8xf32>
    %c0_69 = arith.constant 0 : index
    %c0_70 = arith.constant 0 : index
    %51 = vector.load %arg4[%c0_69, %c0_70] : memref<1x8xf32, #tpu.memory_space<vmem>>, vector<1x8xf32>
    %52 = vector.broadcast %51 : vector<1x8xf32> to vector<64x8xf32>
    %53 = arith.addf %50, %52 : vector<64x8xf32>
    %cst_71 = arith.constant 0.000000e+00 : f32
    %54 = vector.broadcast %cst_71 : f32 to vector<64x8xf32>
    %55 = arith.maximumf %53, %54 : vector<64x8xf32>
    %56 = vector.shape_cast %55 : vector<64x8xf32> to vector<8x8x8xf32>
    %cst_72 = arith.constant 0.000000e+00 : f32
    %57 = vector.broadcast %cst_72 : f32 to vector<1x8x24xf32>
    %cst_73 = arith.constant 0.000000e+00 : f32
    %58 = vector.broadcast %cst_73 : f32 to vector<10x1x8xf32>
    %c0_74 = arith.constant 0 : index
    %c0_75 = arith.constant 0 : index
    %c0_76 = arith.constant 0 : index
    %59 = vector.load %arg10[%c0_74, %c0_75, %c0_76] : memref<10x8x24xf32, #tpu.memory_space<vmem>>, vector<1x8x24xf32>
    tpu.vector_store %arg10[%c0_74, %c0_75, %c0_76], %57 {strides = array<i32>} : memref<10x8x24xf32, #tpu.memory_space<vmem>>, vector<1x8x24xf32>,
    %c9_77 = arith.constant 9 : index
    %c0_78 = arith.constant 0 : index
    %c0_79 = arith.constant 0 : index
    %60 = vector.load %arg10[%c9_77, %c0_78, %c0_79] : memref<10x8x24xf32, #tpu.memory_space<vmem>>, vector<1x8x24xf32>
    tpu.vector_store %arg10[%c9_77, %c0_78, %c0_79], %57 {strides = array<i32>} : memref<10x8x24xf32, #tpu.memory_space<vmem>>, vector<1x8x24xf32>,
    %c0_80 = arith.constant 0 : index
    %c0_81 = arith.constant 0 : index
    %c0_82 = arith.constant 0 : index
    %61 = vector.load %arg10[%c0_80, %c0_81, %c0_82] : memref<10x8x24xf32, #tpu.memory_space<vmem>>, vector<10x1x8xf32>
    tpu.vector_store %arg10[%c0_80, %c0_81, %c0_82], %58 {strides = array<i32>} : memref<10x8x24xf32, #tpu.memory_space<vmem>>, vector<10x1x8xf32>,
    %c0_83 = arith.constant 0 : index
    %c7_84 = arith.constant 7 : index
    %c16 = arith.constant 16 : index
    %62 = vector.load %arg10[%c0_83, %c7_84, %c16] : memref<10x8x24xf32, #tpu.memory_space<vmem>>, vector<10x1x8xf32>
    tpu.vector_store %arg10[%c0_83, %c7_84, %c16], %58 {strides = array<i32>} : memref<10x8x24xf32, #tpu.memory_space<vmem>>, vector<10x1x8xf32>,
    %c1_85 = arith.constant 1 : index
    %c0_86 = arith.constant 0 : index
    %c8_87 = arith.constant 8 : index
    %63 = vector.load %arg10[%c1_85, %c0_86, %c8_87] : memref<10x8x24xf32, #tpu.memory_space<vmem>>, vector<8x8x8xf32>
    tpu.vector_store %arg10[%c1_85, %c0_86, %c8_87], %56 {strides = array<i32>} : memref<10x8x24xf32, #tpu.memory_space<vmem>>, vector<8x8x8xf32>,
    %64 = vector.extract_strided_slice %56 {offsets = [0, 0, 0], sizes = [8, 7, 8], strides = [1, 1, 1]} : vector<8x8x8xf32> to vector<8x7x8xf32>
    %c1_88 = arith.constant 1 : index
    %c1_89 = arith.constant 1 : index
    %c0_90 = arith.constant 0 : index
    %65 = vector.load %arg10[%c1_88, %c1_89, %c0_90] : memref<10x8x24xf32, #tpu.memory_space<vmem>>, vector<8x7x8xf32>
    tpu.vector_store %arg10[%c1_88, %c1_89, %c0_90], %64 {strides = array<i32>} : memref<10x8x24xf32, #tpu.memory_space<vmem>>, vector<8x7x8xf32>,
    %66 = vector.extract_strided_slice %56 {offsets = [0, 1, 0], sizes = [8, 7, 8], strides = [1, 1, 1]} : vector<8x8x8xf32> to vector<8x7x8xf32>
    %c1_91 = arith.constant 1 : index
    %c0_92 = arith.constant 0 : index
    %c16_93 = arith.constant 16 : index
    %67 = vector.load %arg10[%c1_91, %c0_92, %c16_93] : memref<10x8x24xf32, #tpu.memory_space<vmem>>, vector<8x7x8xf32>
    tpu.vector_store %arg10[%c1_91, %c0_92, %c16_93], %66 {strides = array<i32>} : memref<10x8x24xf32, #tpu.memory_space<vmem>>, vector<8x7x8xf32>,
    %c0_94 = arith.constant 0 : index
    %c0_95 = arith.constant 0 : index
    %c0_96 = arith.constant 0 : index
    %68 = vector.load %arg10[%c0_94, %c0_95, %c0_96] : memref<10x8x24xf32, #tpu.memory_space<vmem>>, vector<8x8x24xf32>
    %69 = vector.shape_cast %68 : vector<8x8x24xf32> to vector<64x24xf32>
    %70 = arith.truncf %69 : vector<64x24xf32> to vector<64x24xbf16>
    %c0_97 = arith.constant 0 : index
    %c0_98 = arith.constant 0 : index
    %c0_99 = arith.constant 0 : index
    %71 = vector.load %arg5[%c0_97, %c0_98, %c0_99] : memref<3x24x8xbf16, #tpu.memory_space<vmem>>, vector<1x24x8xbf16>
    %72 = vector.shape_cast %71 : vector<1x24x8xbf16> to vector<24x8xbf16>
    %cst_100 = arith.constant dense<0.000000e+00> : vector<64x8xf32>
    %73 = tpu.matmul %70, %72, %cst_100 {dimension_numbers = #tpu.dot_dimension_numbers<[1], [0], [0], [1], [0, 0, 1, 1], [], []>} : vector<64x24xbf16>, vector<24x8xbf16>, vector<64x8xf32> -> vector<64x8xf32>
    %c0_101 = arith.constant 0 : index
    %c0_102 = arith.constant 0 : index
    %74 = vector.load %arg12[%c0_101, %c0_102] : memref<64x8xf32, #tpu.memory_space<vmem>>, vector<64x8xf32>
    tpu.vector_store %arg12[%c0_101, %c0_102], %73 {strides = array<i32>} : memref<64x8xf32, #tpu.memory_space<vmem>>, vector<64x8xf32>,
    %c1_103 = arith.constant 1 : index
    %c0_104 = arith.constant 0 : index
    %c0_105 = arith.constant 0 : index
    %75 = vector.load %arg10[%c1_103, %c0_104, %c0_105] : memref<10x8x24xf32, #tpu.memory_space<vmem>>, vector<8x8x24xf32>
    %76 = vector.shape_cast %75 : vector<8x8x24xf32> to vector<64x24xf32>
    %77 = arith.truncf %76 : vector<64x24xf32> to vector<64x24xbf16>
    %c1_106 = arith.constant 1 : index
    %c0_107 = arith.constant 0 : index
    %c0_108 = arith.constant 0 : index
    %78 = vector.load %arg5[%c1_106, %c0_107, %c0_108] : memref<3x24x8xbf16, #tpu.memory_space<vmem>>, vector<1x24x8xbf16>
    %79 = vector.shape_cast %78 : vector<1x24x8xbf16> to vector<24x8xbf16>
    %cst_109 = arith.constant dense<0.000000e+00> : vector<64x8xf32>
    %80 = tpu.matmul %77, %79, %cst_109 {dimension_numbers = #tpu.dot_dimension_numbers<[1], [0], [0], [1], [0, 0, 1, 1], [], []>} : vector<64x24xbf16>, vector<24x8xbf16>, vector<64x8xf32> -> vector<64x8xf32>
    %c0_110 = arith.constant 0 : index
    %c0_111 = arith.constant 0 : index
    %81 = vector.load %arg12[%c0_110, %c0_111] : memref<64x8xf32, #tpu.memory_space<vmem>>, vector<64x8xf32>
    %82 = arith.addf %81, %80 : vector<64x8xf32>
    %c0_112 = arith.constant 0 : index
    %c0_113 = arith.constant 0 : index
    %83 = vector.load %arg12[%c0_112, %c0_113] : memref<64x8xf32, #tpu.memory_space<vmem>>, vector<64x8xf32>
    tpu.vector_store %arg12[%c0_112, %c0_113], %82 {strides = array<i32>} : memref<64x8xf32, #tpu.memory_space<vmem>>, vector<64x8xf32>,
    %c2_114 = arith.constant 2 : index
    %c0_115 = arith.constant 0 : index
    %c0_116 = arith.constant 0 : index
    %84 = vector.load %arg10[%c2_114, %c0_115, %c0_116] : memref<10x8x24xf32, #tpu.memory_space<vmem>>, vector<8x8x24xf32>
    %85 = vector.shape_cast %84 : vector<8x8x24xf32> to vector<64x24xf32>
    %86 = arith.truncf %85 : vector<64x24xf32> to vector<64x24xbf16>
    %c2_117 = arith.constant 2 : index
    %c0_118 = arith.constant 0 : index
    %c0_119 = arith.constant 0 : index
    %87 = vector.load %arg5[%c2_117, %c0_118, %c0_119] : memref<3x24x8xbf16, #tpu.memory_space<vmem>>, vector<1x24x8xbf16>
    %88 = vector.shape_cast %87 : vector<1x24x8xbf16> to vector<24x8xbf16>
    %cst_120 = arith.constant dense<0.000000e+00> : vector<64x8xf32>
    %89 = tpu.matmul %86, %88, %cst_120 {dimension_numbers = #tpu.dot_dimension_numbers<[1], [0], [0], [1], [0, 0, 1, 1], [], []>} : vector<64x24xbf16>, vector<24x8xbf16>, vector<64x8xf32> -> vector<64x8xf32>
    %c0_121 = arith.constant 0 : index
    %c0_122 = arith.constant 0 : index
    %90 = vector.load %arg12[%c0_121, %c0_122] : memref<64x8xf32, #tpu.memory_space<vmem>>, vector<64x8xf32>
    %91 = arith.addf %90, %89 : vector<64x8xf32>
    %c0_123 = arith.constant 0 : index
    %c0_124 = arith.constant 0 : index
    %92 = vector.load %arg12[%c0_123, %c0_124] : memref<64x8xf32, #tpu.memory_space<vmem>>, vector<64x8xf32>
    tpu.vector_store %arg12[%c0_123, %c0_124], %91 {strides = array<i32>} : memref<64x8xf32, #tpu.memory_space<vmem>>, vector<64x8xf32>,
    %c0_125 = arith.constant 0 : index
    %c0_126 = arith.constant 0 : index
    %93 = vector.load %arg12[%c0_125, %c0_126] : memref<64x8xf32, #tpu.memory_space<vmem>>, vector<64x8xf32>
    %c0_127 = arith.constant 0 : index
    %c0_128 = arith.constant 0 : index
    %94 = vector.load %arg6[%c0_127, %c0_128] : memref<1x8xf32, #tpu.memory_space<vmem>>, vector<1x8xf32>
    %95 = vector.broadcast %94 : vector<1x8xf32> to vector<64x8xf32>
    %96 = arith.mulf %93, %95 : vector<64x8xf32>
    %c0_129 = arith.constant 0 : index
    %c0_130 = arith.constant 0 : index
    %97 = vector.load %arg7[%c0_129, %c0_130] : memref<1x8xf32, #tpu.memory_space<vmem>>, vector<1x8xf32>
    %98 = vector.broadcast %97 : vector<1x8xf32> to vector<64x8xf32>
    %99 = arith.addf %96, %98 : vector<64x8xf32>
    %cst_131 = arith.constant 0.000000e+00 : f32
    %100 = vector.broadcast %cst_131 : f32 to vector<64x8xf32>
    %101 = arith.maximumf %99, %100 : vector<64x8xf32>
    %c0_132 = arith.constant 0 : index
    %c0_133 = arith.constant 0 : index
    %c0_134 = arith.constant 0 : index
    %102 = vector.load %arg8[%c0_132, %c0_133, %c0_134] : memref<1x64x8xf32, #tpu.memory_space<vmem>>, vector<1x64x8xf32>
    %103 = vector.shape_cast %102 : vector<1x64x8xf32> to vector<64x8xf32>
    %104 = vector.shape_cast %101 : vector<64x8xf32> to vector<1x64x8xf32>
    tpu.vector_store %arg8[%c0_132, %c0_133, %c0_134], %104 {strides = array<i32>} : memref<1x64x8xf32, #tpu.memory_space<vmem>>, vector<1x64x8xf32>,
    return
  }
  func.func @transform_0(%arg0: i32) -> (i32, i32, i32, i32, i32) {
    %c0_i32 = arith.constant 0 : i32
    %c0_i32_0 = arith.constant 0 : i32
    %c0_i32_1 = arith.constant 0 : i32
    %c0_i32_2 = arith.constant 0 : i32
    %c0_i32_3 = arith.constant 0 : i32
    return %arg0, %c0_i32, %c0_i32_0, %c0_i32_1, %c0_i32_2 : i32, i32, i32, i32, i32
  }
  func.func @transform_1(%arg0: i32) -> (i32, i32, i32) {
    %c0_i32 = arith.constant 0 : i32
    %c0_i32_0 = arith.constant 0 : i32
    %c0_i32_1 = arith.constant 0 : i32
    %c0_i32_2 = arith.constant 0 : i32
    return %c0_i32, %c0_i32_0, %c0_i32_1 : i32, i32, i32
  }
  func.func @transform_2(%arg0: i32) -> (i32, i32) {
    %c0_i32 = arith.constant 0 : i32
    %c0_i32_0 = arith.constant 0 : i32
    %c0_i32_1 = arith.constant 0 : i32
    return %c0_i32, %c0_i32_0 : i32, i32
  }
  func.func @transform_3(%arg0: i32) -> (i32, i32) {
    %c0_i32 = arith.constant 0 : i32
    %c0_i32_0 = arith.constant 0 : i32
    %c0_i32_1 = arith.constant 0 : i32
    return %c0_i32, %c0_i32_0 : i32, i32
  }
  func.func @transform_4(%arg0: i32) -> (i32, i32, i32) {
    %c0_i32 = arith.constant 0 : i32
    %c0_i32_0 = arith.constant 0 : i32
    %c0_i32_1 = arith.constant 0 : i32
    %c0_i32_2 = arith.constant 0 : i32
    return %c0_i32, %c0_i32_0, %c0_i32_1 : i32, i32, i32
  }
  func.func @transform_5(%arg0: i32) -> (i32, i32) {
    %c0_i32 = arith.constant 0 : i32
    %c0_i32_0 = arith.constant 0 : i32
    %c0_i32_1 = arith.constant 0 : i32
    return %c0_i32, %c0_i32_0 : i32, i32
  }
  func.func @transform_6(%arg0: i32) -> (i32, i32) {
    %c0_i32 = arith.constant 0 : i32
    %c0_i32_0 = arith.constant 0 : i32
    %c0_i32_1 = arith.constant 0 : i32
    return %c0_i32, %c0_i32_0 : i32, i32
  }
  func.func @transform_7(%arg0: i32) -> (i32, i32, i32) {
    %c0_i32 = arith.constant 0 : i32
    %c0_i32_0 = arith.constant 0 : i32
    %c0_i32_1 = arith.constant 0 : i32
    return %arg0, %c0_i32, %c0_i32_0 : i32, i32, i32
  }
}

</mosaic_0001>

<llo_original>
// kernel: tpu_custom_call.1
$region0: #{tpu_custom_call.1}
  #allocation0 [shape = 'u32[]', space=smem, size = 0x4, offset = 0x4, fixed_abs, tag = 'smem constant byte address 0x4 - core index']
  #allocation1 [shape = 'u32[144,128]{1,0:T(1,128)}', space=vmem, size = 0x12000, scoped, tag = 'internal scratch']
  #allocation2 [shape = 'f32[10,8,12]{2,1,0:T(8,128)}', space=vmem, size = 0xa000, scoped, tag = 'scratch operand']
  #allocation3 [shape = 'f32[10,8,24]{2,1,0:T(8,128)}', space=vmem, size = 0xa000, scoped, tag = 'scratch operand']
  #allocation4 [shape = 'f32[64,8]{1,0:T(8,128)}', space=vmem, size = 0x8000, scoped, tag = 'scratch operand']
  #allocation5 [shape = 'f32[64,8]{1,0:T(8,128)}', space=vmem, size = 0x8000, scoped, tag = 'scratch operand']
  %s0 = inlined_call_operand.vmem [shape: f32[2,4,8,8,4], index: 0, kind: input, shape index: {}]
  %s1 = inlined_call_operand.vmem [shape: bf16[3,12,8], index: 1, kind: input, shape index: {}]
  %s2 = inlined_call_operand.vmem [shape: f32[1,8], index: 2, kind: input, shape index: {}]
  %s3 = inlined_call_operand.vmem [shape: f32[1,8], index: 3, kind: input, shape index: {}]
  %s4 = inlined_call_operand.vmem [shape: bf16[3,24,8], index: 4, kind: input, shape index: {}]
  %s5 = inlined_call_operand.vmem [shape: f32[1,8], index: 5, kind: input, shape index: {}]
  %s6 = inlined_call_operand.vmem [shape: f32[1,8], index: 6, kind: input, shape index: {}]
  %s7 = inlined_call_operand.vmem [shape: f32[2,64,8], index: 7, kind: output, shape index: {}]
  %s8 = sld [smem:[#allocation0]]
  $region61: #{tpu_custom_call.1} parent=0
    _
  %s10 = ssub.s32 1, %s8
  %s11 = scalar_select 0, %s10, %s8
  loop: start=0, step=1, limit=4
  $region2: #{tpu_custom_call.1} parent=0 // loop_pre_header
    _
  $region3: #{tpu_custom_call.1} parent=0 // loop_header
    %s13 = sphi 0, %s17
    %p14 = scmp.ge.s32.totalorder %s13, 4
    %s23 = sphi 0, %s25
    %s26 = sphi 0, %s23
    %s27 = sphi 0, %s26
    %s43 = sphi 0, %s27
    %s47 = sphi 0, %s47
    %s49 = sphi 0, %s47
    %s50 = sphi 0, %s49
    %s64 = sphi 0, %s50
    %s68 = sphi 0, %s68
    %s70 = sphi 0, %s68
    %s71 = sphi 0, %s70
    %s85 = sphi 0, %s71
    %s89 = sphi 0, %s89
    %s91 = sphi 0, %s89
    %s92 = sphi 0, %s91
    %s106 = sphi 0, %s92
    %s110 = sphi 0, %s110
    %s112 = sphi 0, %s110
    %s113 = sphi 0, %s112
    %s127 = sphi 0, %s113
    %s131 = sphi 0, %s131
    %s133 = sphi 0, %s131
    %s134 = sphi 0, %s133
    %s148 = sphi 0, %s134
    %s152 = sphi 0, %s152
    %s154 = sphi 0, %s152
    %s155 = sphi 0, %s154
    %s169 = sphi 0, %s155
    %s175 = sphi 0, %s177
    %s178 = sphi 0, %s175
    %s179 = sphi 0, %s178
    %s195 = sphi 0, %s179
  $region4: #{tpu_custom_call.1} parent=0 // loop_header_branch
    %16 = sbr.rel (%p14) target = $region8
  $region5: #{tpu_custom_call.1} parent=0 // loop_body
    %s18 = ssub.s32 %s13, 1
    %s19 = ssub.s32 %s13, 2
    %s20 = sadd.s32 %s13, 1
    %s21 = ssub.s32 %s13, %s20
    %p22 = scmp.eq.s32.totalorder %s21, 0
    %s24 = sadd.s32 %s23, 1
    %s25 = scalar_select %p22, %s23, %s24
    %p28 = pneg %p22
    %p29 = scmp.eq.s32.totalorder %s13, 1
    %p30 = por %p28, %p29
    %p31 = scmp.ne.s32.totalorder %s23, %s26
    %p32 = scmp.eq.s32.totalorder %s13, 0
    %p33 = por %p31, %p32
    %p34 = scmp.ne.s32.totalorder %s23, %s26
    %p35 = scmp.eq.s32.totalorder %s18, 1
    %p36 = por %p34, %p35
    %p37 = scmp.ne.s32.totalorder %s26, %s27
    %p38 = scmp.eq.s32.totalorder %s18, 0
    %p39 = por %p37, %p38
    %p40 = scmp.ne.s32.totalorder %s26, %s27
    %p41 = scmp.eq.s32.totalorder %s19, 1
    %p42 = por %p40, %p41
    %p44 = scmp.ne.s32.totalorder %s27, %s43
    %p45 = scmp.eq.s32.totalorder %s19, 0
    %p46 = por %p44, %p45
    %s48 = sadd.s32 %s47, 1
    %p51 = scmp.eq.s32.totalorder %s13, 1
    %p52 = scmp.ne.s32.totalorder %s47, %s49
    %p53 = scmp.eq.s32.totalorder %s13, 0
    %p54 = por %p52, %p53
    %p55 = scmp.ne.s32.totalorder %s47, %s49
    %p56 = scmp.eq.s32.totalorder %s18, 1
    %p57 = por %p55, %p56
    %p58 = scmp.ne.s32.totalorder %s49, %s50
    %p59 = scmp.eq.s32.totalorder %s18, 0
    %p60 = por %p58, %p59
    %p61 = scmp.ne.s32.totalorder %s49, %s50
    %p62 = scmp.eq.s32.totalorder %s19, 1
    %p63 = por %p61, %p62
    %p65 = scmp.ne.s32.totalorder %s50, %s64
    %p66 = scmp.eq.s32.totalorder %s19, 0
    %p67 = por %p65, %p66
    %s69 = sadd.s32 %s68, 1
    %p72 = scmp.eq.s32.totalorder %s13, 1
    %p73 = scmp.ne.s32.totalorder %s68, %s70
    %p74 = scmp.eq.s32.totalorder %s13, 0
    %p75 = por %p73, %p74
    %p76 = scmp.ne.s32.totalorder %s68, %s70
    %p77 = scmp.eq.s32.totalorder %s18, 1
    %p78 = por %p76, %p77
    %p79 = scmp.ne.s32.totalorder %s70, %s71
    %p80 = scmp.eq.s32.totalorder %s18, 0
    %p81 = por %p79, %p80
    %p82 = scmp.ne.s32.totalorder %s70, %s71
    %p83 = scmp.eq.s32.totalorder %s19, 1
    %p84 = por %p82, %p83
    %p86 = scmp.ne.s32.totalorder %s71, %s85
    %p87 = scmp.eq.s32.totalorder %s19, 0
    %p88 = por %p86, %p87
    %s90 = sadd.s32 %s89, 1
    %p93 = scmp.eq.s32.totalorder %s13, 1
    %p94 = scmp.ne.s32.totalorder %s89, %s91
    %p95 = scmp.eq.s32.totalorder %s13, 0
    %p96 = por %p94, %p95
    %p97 = scmp.ne.s32.totalorder %s89, %s91
    %p98 = scmp.eq.s32.totalorder %s18, 1
    %p99 = por %p97, %p98
    %p100 = scmp.ne.s32.totalorder %s91, %s92
    %p101 = scmp.eq.s32.totalorder %s18, 0
    %p102 = por %p100, %p101
    %p103 = scmp.ne.s32.totalorder %s91, %s92
    %p104 = scmp.eq.s32.totalorder %s19, 1
    %p105 = por %p103, %p104
    %p107 = scmp.ne.s32.totalorder %s92, %s106
    %p108 = scmp.eq.s32.totalorder %s19, 0
    %p109 = por %p107, %p108
    %s111 = sadd.s32 %s110, 1
    %p114 = scmp.eq.s32.totalorder %s13, 1
    %p115 = scmp.ne.s32.totalorder %s110, %s112
    %p116 = scmp.eq.s32.totalorder %s13, 0
    %p117 = por %p115, %p116
    %p118 = scmp.ne.s32.totalorder %s110, %s112
    %p119 = scmp.eq.s32.totalorder %s18, 1
    %p120 = por %p118, %p119
    %p121 = scmp.ne.s32.totalorder %s112, %s113
    %p122 = scmp.eq.s32.totalorder %s18, 0
    %p123 = por %p121, %p122
    %p124 = scmp.ne.s32.totalorder %s112, %s113
    %p125 = scmp.eq.s32.totalorder %s19, 1
    %p126 = por %p124, %p125
    %p128 = scmp.ne.s32.totalorder %s113, %s127
    %p129 = scmp.eq.s32.totalorder %s19, 0
    %p130 = por %p128, %p129
    %s132 = sadd.s32 %s131, 1
    %p135 = scmp.eq.s32.totalorder %s13, 1
    %p136 = scmp.ne.s32.totalorder %s131, %s133
    %p137 = scmp.eq.s32.totalorder %s13, 0
    %p138 = por %p136, %p137
    %p139 = scmp.ne.s32.totalorder %s131, %s133
    %p140 = scmp.eq.s32.totalorder %s18, 1
    %p141 = por %p139, %p140
    %p142 = scmp.ne.s32.totalorder %s133, %s134
    %p143 = scmp.eq.s32.totalorder %s18, 0
    %p144 = por %p142, %p143
    %p145 = scmp.ne.s32.totalorder %s133, %s134
    %p146 = scmp.eq.s32.totalorder %s19, 1
    %p147 = por %p145, %p146
    %p149 = scmp.ne.s32.totalorder %s134, %s148
    %p150 = scmp.eq.s32.totalorder %s19, 0
    %p151 = por %p149, %p150
    %s153 = sadd.s32 %s152, 1
    %p156 = scmp.eq.s32.totalorder %s13, 1
    %p157 = scmp.ne.s32.totalorder %s152, %s154
    %p158 = scmp.eq.s32.totalorder %s13, 0
    %p159 = por %p157, %p158
    %p160 = scmp.ne.s32.totalorder %s152, %s154
    %p161 = scmp.eq.s32.totalorder %s18, 1
    %p162 = por %p160, %p161
    %p163 = scmp.ne.s32.totalorder %s154, %s155
    %p164 = scmp.eq.s32.totalorder %s18, 0
    %p165 = por %p163, %p164
    %p166 = scmp.ne.s32.totalorder %s154, %s155
    %p167 = scmp.eq.s32.totalorder %s19, 1
    %p168 = por %p166, %p167
    %p170 = scmp.ne.s32.totalorder %s155, %s169
    %p171 = scmp.eq.s32.totalorder %s19, 0
    %p172 = por %p170, %p171
    %s173 = ssub.s32 %s13, %s20
    %p174 = scmp.eq.s32.totalorder %s173, 0
    %s176 = sadd.s32 %s175, 1
    %s177 = scalar_select %p174, %s175, %s176
    %p180 = pneg %p174
    %p181 = scmp.eq.s32.totalorder %s13, 1
    %p182 = por %p180, %p181
    %p183 = scmp.ne.s32.totalorder %s175, %s178
    %p184 = scmp.eq.s32.totalorder %s13, 0
    %p185 = por %p183, %p184
    %p186 = scmp.ne.s32.totalorder %s175, %s178
    %p187 = scmp.eq.s32.totalorder %s18, 1
    %p188 = por %p186, %p187
    %p189 = scmp.ne.s32.totalorder %s178, %s179
    %p190 = scmp.eq.s32.totalorder %s18, 0
    %p191 = por %p189, %p190
    %p192 = scmp.ne.s32.totalorder %s178, %s179
    %p193 = scmp.eq.s32.totalorder %s19, 1
    %p194 = por %p192, %p193
    %p196 = scmp.ne.s32.totalorder %s179, %s195
    %p197 = scmp.eq.s32.totalorder %s19, 0
    %p198 = por %p196, %p197
    %p199 = scmp.le.s32.totalorder 1, %s13
    %p200 = scmp.lt.s32.totalorder %s13, 3
    %p201 = pnand %p199, %p200
    %p202 = pneg %p201
    // Predicated region
    $region9: #{tpu_custom_call.1} parent=5 // pred_check
      _
    $region10: #{tpu_custom_call.1} parent=5 // pred_check_branch
      %204 = sbr.rel (%p201) target = $region12
    $region11: #{tpu_custom_call.1} parent=5 // pred_region
      %s205 = ssub.s32 %s13, 1
      // Predicated region
      $region13: #{tpu_custom_call.1} parent=11 // pred_check
        %p206 = pneg %p60
      $region14: #{tpu_custom_call.1} parent=11 // pred_check_branch
        %208 = sbr.rel (%p206) target = $region16
      $region15: #{tpu_custom_call.1} parent=11 // pred_region
        _
      $region16: #{tpu_custom_call.1} parent=11 // pred_fallthru
        _
      // Predicated region
      $region17: #{tpu_custom_call.1} parent=11 // pred_check
        %p209 = pneg %p81
      $region18: #{tpu_custom_call.1} parent=11 // pred_check_branch
        %211 = sbr.rel (%p209) target = $region20
      $region19: #{tpu_custom_call.1} parent=11 // pred_region
        _
      $region20: #{tpu_custom_call.1} parent=11 // pred_fallthru
        _
      // Predicated region
      $region21: #{tpu_custom_call.1} parent=11 // pred_check
        %p212 = pneg %p102
      $region22: #{tpu_custom_call.1} parent=11 // pred_check_branch
        %214 = sbr.rel (%p212) target = $region24
      $region23: #{tpu_custom_call.1} parent=11 // pred_region
        _
      $region24: #{tpu_custom_call.1} parent=11 // pred_fallthru
        _
      // Predicated region
      $region25: #{tpu_custom_call.1} parent=11 // pred_check
        %p215 = pneg %p123
      $region26: #{tpu_custom_call.1} parent=11 // pred_check_branch
        %217 = sbr.rel (%p215) target = $region28
      $region27: #{tpu_custom_call.1} parent=11 // pred_region
        _
      $region28: #{tpu_custom_call.1} parent=11 // pred_fallthru
        _
      // Predicated region
      $region29: #{tpu_custom_call.1} parent=11 // pred_check
        %p218 = pneg %p144
      $region30: #{tpu_custom_call.1} parent=11 // pred_check_branch
        %220 = sbr.rel (%p218) target = $region32
      $region31: #{tpu_custom_call.1} parent=11 // pred_region
        _
      $region32: #{tpu_custom_call.1} parent=11 // pred_fallthru
        _
      // Predicated region
      $region33: #{tpu_custom_call.1} parent=11 // pred_check
        %p221 = pneg %p165
      $region34: #{tpu_custom_call.1} parent=11 // pred_check_branch
        %223 = sbr.rel (%p221) target = $region36
      $region35: #{tpu_custom_call.1} parent=11 // pred_region
        _
      $region36: #{tpu_custom_call.1} parent=11 // pred_fallthru
        _
    $region12: #{tpu_custom_call.1} parent=5 // pred_fallthru
      _
    %p224 = scmp.lt.s32.totalorder %s13, 2
    // Predicated region
    $region37: #{tpu_custom_call.1} parent=5 // pred_check
      %p225 = pneg %p224
    $region38: #{tpu_custom_call.1} parent=5 // pred_check_branch
      %227 = sbr.rel (%p225) target = $region40
    $region39: #{tpu_custom_call.1} parent=5 // pred_region
      // Predicated region
      $region41: #{tpu_custom_call.1} parent=39 // pred_check
        %p228 = pneg %p33
      $region42: #{tpu_custom_call.1} parent=39 // pred_check_branch
        %230 = sbr.rel (%p228) target = $region44
      $region43: #{tpu_custom_call.1} parent=39 // pred_region
        %p231 = scmp.lt.s32.totalorder %s13, 1
        %s232 = scalar_select %p231, %s13, 1
        %s233 = smul.addr %s232, 32
        %s234 = smul.addr %s233, 8
        %s235 = scalar_lea.vmem %s0, %s234
      $region44: #{tpu_custom_call.1} parent=39 // pred_fallthru
        _
    $region40: #{tpu_custom_call.1} parent=5 // pred_fallthru
      _
    %p236 = scmp.le.s32.totalorder 1, %s13
    %p237 = scmp.lt.s32.totalorder %s13, 3
    %p238 = pnand %p236, %p237
    %p239 = pneg %p238
    // Predicated region
    $region45: #{tpu_custom_call.1} parent=5 // pred_check
      _
    $region46: #{tpu_custom_call.1} parent=5 // pred_check_branch
      %241 = sbr.rel (%p238) target = $region48
    $region47: #{tpu_custom_call.1} parent=5 // pred_region
      %s242 = ssub.s32 %s13, 1
      %p243 = scmp.lt.s32.totalorder %s18, 1
      %s244 = scalar_select %p243, %s18, 1
      %s245 = smul.addr %s244, 32
      %s246 = smul.addr %s245, 8
      %s247 = scalar_lea.vmem %s0, %s246
      %p248 = pneg %p39
      %p249 = pneg %p36
      %p250 = pneg %p60
      %p251 = pneg %p57
      %p252 = pneg %p81
      %p253 = pneg %p78
      %p254 = pneg %p102
      %p255 = pneg %p99
      %p256 = pneg %p123
      %p257 = pneg %p120
      %p258 = pneg %p144
      %p259 = pneg %p141
      %p260 = pneg %p165
      %p261 = pneg %p162
      %p262 = pneg %p191
      %p263 = pneg %p188
      %p264 = scmp.lt.s32.totalorder %s18, 1
      %s265 = scalar_select %p264, %s18, 1
      %s266 = smul.addr %s265, 8
      %s267 = smul.addr %s266, 8
      %s268 = scalar_lea.vmem %s7, %s267
      %p269 = scmp.lt.s32.totalorder %s18, 1
      %s270 = scalar_select %p269, %s18, 1
      %s271 = smul.addr %s270, 32
      %s272 = smul.addr %s271, 8
      %s273 = scalar_lea.vmem %s0, %s272
      %p274 = scmp.lt.s32.totalorder %s18, 1
      %s275 = scalar_select %p274, %s18, 1
      %s276 = smul.addr %s275, 8
      %s277 = smul.addr %s276, 8
      %s278 = scalar_lea.vmem %s7, %s277
      %v280 = vld [vmem:[%s273] sm:$0xff]
      %v281 = vld [vmem:[%s273 + $0x8] sm:$0xff]
      %v282 = vld [vmem:[%s273 + $0x10] sm:$0xff]
      %v283 = vld [vmem:[%s273 + $0x18] sm:$0xff]
      %v284 = vld [vmem:[%s273 + $0x20] sm:$0xff]
      %v285 = vld [vmem:[%s273 + $0x28] sm:$0xff]
      %v286 = vld [vmem:[%s273 + $0x30] sm:$0xff]
      %v287 = vld [vmem:[%s273 + $0x38] sm:$0xff]
      %s288 = scalar_lea.vmem %s273, 64
      %v289 = vld [vmem:[%s288] sm:$0xff]
      %v290 = vld [vmem:[%s288 + $0x8] sm:$0xff]
      %v291 = vld [vmem:[%s288 + $0x10] sm:$0xff]
      %v292 = vld [vmem:[%s288 + $0x18] sm:$0xff]
      %v293 = vld [vmem:[%s288 + $0x20] sm:$0xff]
      %v294 = vld [vmem:[%s288 + $0x28] sm:$0xff]
      %v295 = vld [vmem:[%s288 + $0x30] sm:$0xff]
      %v296 = vld [vmem:[%s288 + $0x38] sm:$0xff]
      %v297 = vmax.f32 %v280, %v289
      %v298 = vmax.f32 %v281, %v290
      %v299 = vmax.f32 %v282, %v291
      %v300 = vmax.f32 %v283, %v292
      %v301 = vmax.f32 %v284, %v293
      %v302 = vmax.f32 %v285, %v294
      %v303 = vmax.f32 %v286, %v295
      %v304 = vmax.f32 %v287, %v296
      %s305 = scalar_lea.vmem %s273, 128
      %v306 = vld [vmem:[%s305] sm:$0xff]
      %v307 = vld [vmem:[%s305 + $0x8] sm:$0xff]
      %v308 = vld [vmem:[%s305 + $0x10] sm:$0xff]
      %v309 = vld [vmem:[%s305 + $0x18] sm:$0xff]
      %v310 = vld [vmem:[%s305 + $0x20] sm:$0xff]
      %v311 = vld [vmem:[%s305 + $0x28] sm:$0xff]
      %v312 = vld [vmem:[%s305 + $0x30] sm:$0xff]
      %v313 = vld [vmem:[%s305 + $0x38] sm:$0xff]
      %s314 = scalar_lea.vmem %s273, 192
      %v315 = vld [vmem:[%s314] sm:$0xff]
      %v316 = vld [vmem:[%s314 + $0x8] sm:$0xff]
      %v317 = vld [vmem:[%s314 + $0x10] sm:$0xff]
      %v318 = vld [vmem:[%s314 + $0x18] sm:$0xff]
      %v319 = vld [vmem:[%s314 + $0x20] sm:$0xff]
      %v320 = vld [vmem:[%s314 + $0x28] sm:$0xff]
      %v321 = vld [vmem:[%s314 + $0x30] sm:$0xff]
      %v322 = vld [vmem:[%s314 + $0x38] sm:$0xff]
      %v323 = vmax.f32 %v306, %v315
      %v324 = vmax.f32 %v307, %v316
      %v325 = vmax.f32 %v308, %v317
      %v326 = vmax.f32 %v309, %v318
      %v327 = vmax.f32 %v310, %v319
      %v328 = vmax.f32 %v311, %v320
      %v329 = vmax.f32 %v312, %v321
      %v330 = vmax.f32 %v313, %v322
      %v331 = vmax.f32 %v297, %v323
      %v332 = vmax.f32 %v298, %v324
      %v333 = vmax.f32 %v299, %v325
      %v334 = vmax.f32 %v300, %v326
      %v335 = vmax.f32 %v301, %v327
      %v336 = vmax.f32 %v302, %v328
      %v337 = vmax.f32 %v303, %v329
      %v338 = vmax.f32 %v304, %v330
      %vm339 = vcmask 97280
      %340 = vst.msk [vmem:[#allocation2] sm:$0xff] %vm339, 0.0
      %s341 = scalar_lea.vmem [#allocation2], 72
      %342 = vst.msk [vmem:[%s341] sm:$0xff] %vm339, 0.0
      %vm343 = vcmask 24576
      %344 = vst.msk [vmem:[#allocation2] sm:$0x1] %vm343, 0.0
      %345 = vst.msk [vmem:[#allocation2 + $0x8] sm:$0x1] %vm343, 0.0
      %346 = vst.msk [vmem:[#allocation2 + $0x10] sm:$0x1] %vm343, 0.0
      %347 = vst.msk [vmem:[#allocation2 + $0x18] sm:$0x1] %vm343, 0.0
      %348 = vst.msk [vmem:[#allocation2 + $0x20] sm:$0x1] %vm343, 0.0
      %349 = vst.msk [vmem:[#allocation2 + $0x28] sm:$0x1] %vm343, 0.0
      %350 = vst.msk [vmem:[#allocation2 + $0x30] sm:$0x1] %vm343, 0.0
      %351 = vst.msk [vmem:[#allocation2 + $0x38] sm:$0x1] %vm343, 0.0
      %352 = vst.msk [vmem:[#allocation2 + $0x40] sm:$0x1] %vm343, 0.0
      %353 = vst.msk [vmem:[#allocation2 + $0x48] sm:$0x1] %vm343, 0.0
      %vm354 = vcmask 90176
      %355 = vst.msk [vmem:[#allocation2 + $0x7] sm:$0x1] %vm354, 0.0
      %356 = vst.msk [vmem:[#allocation2 + $0xf] sm:$0x1] %vm354, 0.0
      %357 = vst.msk [vmem:[#allocation2 + $0x17] sm:$0x1] %vm354, 0.0
      %358 = vst.msk [vmem:[#allocation2 + $0x1f] sm:$0x1] %vm354, 0.0
      %359 = vst.msk [vmem:[#allocation2 + $0x27] sm:$0x1] %vm354, 0.0
      %360 = vst.msk [vmem:[#allocation2 + $0x2f] sm:$0x1] %vm354, 0.0
      %361 = vst.msk [vmem:[#allocation2 + $0x37] sm:$0x1] %vm354, 0.0
      %362 = vst.msk [vmem:[#allocation2 + $0x3f] sm:$0x1] %vm354, 0.0
      %363 = vst.msk [vmem:[#allocation2 + $0x47] sm:$0x1] %vm354, 0.0
      %364 = vst.msk [vmem:[#allocation2 + $0x4f] sm:$0x1] %vm354, 0.0
      %373 = vrot.lane.b32.xlu0 %v331, 4
      %v374 = vpop.permute.xlu0 %373
      %375 = vrot.lane.b32.xlu0 %v332, 4
      %v376 = vpop.permute.xlu0 %375
      %377 = vrot.lane.b32.xlu0 %v333, 4
      %v378 = vpop.permute.xlu0 %377
      %379 = vrot.lane.b32.xlu0 %v334, 4
      %v380 = vpop.permute.xlu0 %379
      %381 = vrot.lane.b32.xlu0 %v335, 4
      %v382 = vpop.permute.xlu0 %381
      %383 = vrot.lane.b32.xlu0 %v336, 4
      %v384 = vpop.permute.xlu0 %383
      %385 = vrot.lane.b32.xlu0 %v337, 4
      %v386 = vpop.permute.xlu0 %385
      %387 = vrot.lane.b32.xlu0 %v338, 4
      %v388 = vpop.permute.xlu0 %387
      %s397 = scalar_lea.vmem [#allocation2], 8
      %vm398 = vcmask 64544
      %399 = vst.msk [vmem:[%s397] sm:$0xff] %vm398, %v374
      %400 = vst.msk [vmem:[%s397 + $0x8] sm:$0xff] %vm398, %v376
      %401 = vst.msk [vmem:[%s397 + $0x10] sm:$0xff] %vm398, %v378
      %402 = vst.msk [vmem:[%s397 + $0x18] sm:$0xff] %vm398, %v380
      %403 = vst.msk [vmem:[%s397 + $0x20] sm:$0xff] %vm398, %v382
      %404 = vst.msk [vmem:[%s397 + $0x28] sm:$0xff] %vm398, %v384
      %405 = vst.msk [vmem:[%s397 + $0x30] sm:$0xff] %vm398, %v386
      %406 = vst.msk [vmem:[%s397 + $0x38] sm:$0xff] %vm398, %v388
      %vm407 = vcmask 30720
      %408 = vst.msk [vmem:[%s397 + $0x1] sm:$0x7f] %vm407, %v331
      %409 = vst.msk [vmem:[%s397 + $0x9] sm:$0x7f] %vm407, %v332
      %410 = vst.msk [vmem:[%s397 + $0x11] sm:$0x7f] %vm407, %v333
      %411 = vst.msk [vmem:[%s397 + $0x19] sm:$0x7f] %vm407, %v334
      %412 = vst.msk [vmem:[%s397 + $0x21] sm:$0x7f] %vm407, %v335
      %413 = vst.msk [vmem:[%s397 + $0x29] sm:$0x7f] %vm407, %v336
      %414 = vst.msk [vmem:[%s397 + $0x31] sm:$0x7f] %vm407, %v337
      %415 = vst.msk [vmem:[%s397 + $0x39] sm:$0x7f] %vm407, %v338
      %416 = vrot.lane.b32.xlu0 %v331, 8
      %v417 = vpop.permute.xlu0 %416
      %418 = vrot.lane.b32.xlu0 %v332, 8
      %v419 = vpop.permute.xlu0 %418
      %420 = vrot.lane.b32.xlu0 %v333, 8
      %v421 = vpop.permute.xlu0 %420
      %422 = vrot.lane.b32.xlu0 %v334, 8
      %v423 = vpop.permute.xlu0 %422
      %424 = vrot.lane.b32.xlu0 %v335, 8
      %v425 = vpop.permute.xlu0 %424
      %426 = vrot.lane.b32.xlu0 %v336, 8
      %v427 = vpop.permute.xlu0 %426
      %428 = vrot.lane.b32.xlu0 %v337, 8
      %v429 = vpop.permute.xlu0 %428
      %430 = vrot.lane.b32.xlu0 %v338, 8
      %v431 = vpop.permute.xlu0 %430
      %vm440 = vcmask 97345
      %441 = vst.msk [vmem:[%s397 - $0x1] sm:$0xfe] %vm440, %v417
      %442 = vst.msk [vmem:[%s397 + $0x7] sm:$0xfe] %vm440, %v419
      %443 = vst.msk [vmem:[%s397 + $0xf] sm:$0xfe] %vm440, %v421
      %444 = vst.msk [vmem:[%s397 + $0x17] sm:$0xfe] %vm440, %v423
      %445 = vst.msk [vmem:[%s397 + $0x1f] sm:$0xfe] %vm440, %v425
      %446 = vst.msk [vmem:[%s397 + $0x27] sm:$0xfe] %vm440, %v427
      %447 = vst.msk [vmem:[%s397 + $0x2f] sm:$0xfe] %vm440, %v429
      %448 = vst.msk [vmem:[%s397 + $0x37] sm:$0xfe] %vm440, %v431
      %v449 = vld [vmem:[#allocation2] sm:$0xff]
      %v450 = vld [vmem:[#allocation2 + $0x8] sm:$0xff]
      %v451 = vld [vmem:[#allocation2 + $0x10] sm:$0xff]
      %v452 = vld [vmem:[#allocation2 + $0x18] sm:$0xff]
      %v453 = vld [vmem:[#allocation2 + $0x20] sm:$0xff]
      %v454 = vld [vmem:[#allocation2 + $0x28] sm:$0xff]
      %v455 = vld [vmem:[#allocation2 + $0x30] sm:$0xff]
      %v456 = vld [vmem:[#allocation2 + $0x38] sm:$0xff]
      %v457 = vpack.c.bf16 %v450, %v449
      %v458 = vpack.c.bf16 %v452, %v451
      %v459 = vpack.c.bf16 %v454, %v453
      %v460 = vpack.c.bf16 %v456, %v455
      %v461 = vld [vmem:[%s1] sm:$0xf]
      %v462 = vld [vmem:[%s1 + $0x4] sm:$0x3]
      %v465 = vunpack.c.l.b16 %v461
      %v466 = vunpack.c.l.b16 %v462
      %v467 = vpack.c.b16 %v466, %v465
      %v469 = vsel %vm339, %v457, 0
      %v472 = vsel %vm339, %v458, 0
      %v475 = vsel %vm339, %v459, 0
      %v478 = vsel %vm339, %v460, 0
      %vm480 = vcmask 1045504
      %v482 = vsel %vm480, %v467, 0
      %484 = vmatprep.subr.bf16.mxu0 0
      %485 = vmatpush1.bf16.msra.mxu0 %v482
      %486 = vmatprep.subr.bf16.mxu0 0
      %487 = vmatpush1.bf16.msra.mxu0 0
      %488 = vmatprep.subr.bf16.mxu0 0
      %489 = vmatpush1.bf16.msra.mxu0 0
      %490 = vmatprep.subr.bf16.mxu0 0
      %491 = vmatpush1.bf16.msra.mxu0 0
      %492 = vmatprep.subr.bf16.mxu0 0
      %493 = vmatpush1.bf16.msra.mxu0 0
      %494 = vmatprep.subr.bf16.mxu0 0
      %495 = vmatpush1.bf16.msra.mxu0 0
      %496 = vmatprep.subr.bf16.mxu0 0
      %497 = vmatpush1.bf16.msra.mxu0 0
      %498 = vmatprep.subr.bf16.mxu0 0
      %499 = vmatpush1.bf16.msra.mxu0 0
      %500 = vmatprep.subr.bf16.mxu0 0
      %501 = vmatpush1.bf16.msra.mxu0 0
      %502 = vmatprep.subr.bf16.mxu0 0
      %503 = vmatpush1.bf16.msra.mxu0 0
      %504 = vmatprep.subr.bf16.mxu0 0
      %505 = vmatpush1.bf16.msra.mxu0 0
      %506 = vmatprep.subr.bf16.mxu0 0
      %507 = vmatpush1.bf16.msra.mxu0 0
      %508 = vmatprep.subr.bf16.mxu0 0
      %509 = vmatpush1.bf16.msra.mxu0 0
      %510 = vmatprep.subr.bf16.mxu0 0
      %511 = vmatpush1.bf16.msra.mxu0 0
      %512 = vmatprep.subr.bf16.mxu0 0
      %513 = vmatpush1.bf16.msra.mxu0 0
      %514 = vmatprep.subr.bf16.mxu0 0
      %515 = vmatpush1.bf16.msra.mxu0 0
      %516 = vmatprep.mubr.bf16.mxu0 0
      %517 = vmatmul.mubr.bf16.gmra.mrb[0].mxu0 %v469
      %v518 = vpop.f32.mrb[0].mxu0
      %v519 = vadd.f32 0.0, %v518
      %v520 = vpop.f32.mrb[0].mxu0
      %v521 = vpop.f32.mrb[0].mxu0
      %v522 = vadd.f32 0.0, %v521
      %v523 = vpop.f32.mrb[0].mxu0
      %524 = vmatprep.mubr.bf16.mxu0 0
      %525 = vmatmul.mubr.bf16.gmra.mrb[0].mxu0 %v472
      %v526 = vpop.f32.mrb[0].mxu0
      %v527 = vadd.f32 0.0, %v526
      %v528 = vpop.f32.mrb[0].mxu0
      %v529 = vpop.f32.mrb[0].mxu0
      %v530 = vadd.f32 0.0, %v529
      %v531 = vpop.f32.mrb[0].mxu0
      %532 = vmatprep.mubr.bf16.mxu0 0
      %533 = vmatmul.mubr.bf16.gmra.mrb[0].mxu0 %v475
      %v534 = vpop.f32.mrb[0].mxu0
      %v535 = vadd.f32 0.0, %v534
      %v536 = vpop.f32.mrb[0].mxu0
      %v537 = vpop.f32.mrb[0].mxu0
      %v538 = vadd.f32 0.0, %v537
      %v539 = vpop.f32.mrb[0].mxu0
      %540 = vmatprep.mubr.bf16.mxu0 0
      %541 = vmatmul.mubr.bf16.gmra.mrb[0].mxu0 %v478
      %v542 = vpop.f32.mrb[0].mxu0
      %v543 = vadd.f32 0.0, %v542
      %v544 = vpop.f32.mrb[0].mxu0
      %v545 = vpop.f32.mrb[0].mxu0
      %v546 = vadd.f32 0.0, %v545
      %v547 = vpop.f32.mrb[0].mxu0
      %548 = vdwg.mxu0
      %vm549 = vcmask 64512
      %550 = vst.msk [vmem:[#allocation4] sm:$0xff] %vm549, %v519
      %551 = vst.msk [vmem:[#allocation4 + $0x8] sm:$0xff] %vm549, %v522
      %552 = vst.msk [vmem:[#allocation4 + $0x10] sm:$0xff] %vm549, %v527
      %553 = vst.msk [vmem:[#allocation4 + $0x18] sm:$0xff] %vm549, %v530
      %554 = vst.msk [vmem:[#allocation4 + $0x20] sm:$0xff] %vm549, %v535
      %555 = vst.msk [vmem:[#allocation4 + $0x28] sm:$0xff] %vm549, %v538
      %556 = vst.msk [vmem:[#allocation4 + $0x30] sm:$0xff] %vm549, %v543
      %557 = vst.msk [vmem:[#allocation4 + $0x38] sm:$0xff] %vm549, %v546
      %v558 = vld [vmem:[%s397] sm:$0xff]
      %v559 = vld [vmem:[%s397 + $0x8] sm:$0xff]
      %v560 = vld [vmem:[%s397 + $0x10] sm:$0xff]
      %v561 = vld [vmem:[%s397 + $0x18] sm:$0xff]
      %v562 = vld [vmem:[%s397 + $0x20] sm:$0xff]
      %v563 = vld [vmem:[%s397 + $0x28] sm:$0xff]
      %v564 = vld [vmem:[%s397 + $0x30] sm:$0xff]
      %v565 = vld [vmem:[%s397 + $0x38] sm:$0xff]
      %v566 = vpack.c.bf16 %v559, %v558
      %v567 = vpack.c.bf16 %v561, %v560
      %v568 = vpack.c.bf16 %v563, %v562
      %v569 = vpack.c.bf16 %v565, %v564
      %s570 = scalar_lea.vmem %s1, 8
      %v571 = vld [vmem:[%s570] sm:$0xf]
      %v572 = vld [vmem:[%s570 + $0x4] sm:$0x3]
      %v575 = vunpack.c.l.b16 %v571
      %v576 = vunpack.c.l.b16 %v572
      %v577 = vpack.c.b16 %v576, %v575
      %v579 = vsel %vm339, %v566, 0
      %v582 = vsel %vm339, %v567, 0
      %v585 = vsel %vm339, %v568, 0
      %v588 = vsel %vm339, %v569, 0
      %v591 = vsel %vm480, %v577, 0
      %593 = vmatprep.subr.bf16.mxu0 0
      %594 = vmatpush1.bf16.msra.mxu0 %v591
      %595 = vmatprep.subr.bf16.mxu0 0
      %596 = vmatpush1.bf16.msra.mxu0 0
      %597 = vmatprep.subr.bf16.mxu0 0
      %598 = vmatpush1.bf16.msra.mxu0 0
      %599 = vmatprep.subr.bf16.mxu0 0
      %600 = vmatpush1.bf16.msra.mxu0 0
      %601 = vmatprep.subr.bf16.mxu0 0
      %602 = vmatpush1.bf16.msra.mxu0 0
      %603 = vmatprep.subr.bf16.mxu0 0
      %604 = vmatpush1.bf16.msra.mxu0 0
      %605 = vmatprep.subr.bf16.mxu0 0
      %606 = vmatpush1.bf16.msra.mxu0 0
      %607 = vmatprep.subr.bf16.mxu0 0
      %608 = vmatpush1.bf16.msra.mxu0 0
      %609 = vmatprep.subr.bf16.mxu0 0
      %610 = vmatpush1.bf16.msra.mxu0 0
      %611 = vmatprep.subr.bf16.mxu0 0
      %612 = vmatpush1.bf16.msra.mxu0 0
      %613 = vmatprep.subr.bf16.mxu0 0
      %614 = vmatpush1.bf16.msra.mxu0 0
      %615 = vmatprep.subr.bf16.mxu0 0
      %616 = vmatpush1.bf16.msra.mxu0 0
      %617 = vmatprep.subr.bf16.mxu0 0
      %618 = vmatpush1.bf16.msra.mxu0 0
      %619 = vmatprep.subr.bf16.mxu0 0
      %620 = vmatpush1.bf16.msra.mxu0 0
      %621 = vmatprep.subr.bf16.mxu0 0
      %622 = vmatpush1.bf16.msra.mxu0 0
      %623 = vmatprep.subr.bf16.mxu0 0
      %624 = vmatpush1.bf16.msra.mxu0 0
      %625 = vmatprep.mubr.bf16.mxu0 0
      %626 = vmatmul.mubr.bf16.gmra.mrb[0].mxu0 %v579
      %v627 = vpop.f32.mrb[0].mxu0
      %v628 = vadd.f32 0.0, %v627
      %v629 = vpop.f32.mrb[0].mxu0
      %v630 = vpop.f32.mrb[0].mxu0
      %v631 = vadd.f32 0.0, %v630
      %v632 = vpop.f32.mrb[0].mxu0
      %633 = vmatprep.mubr.bf16.mxu0 0
      %634 = vmatmul.mubr.bf16.gmra.mrb[0].mxu0 %v582
      %v635 = vpop.f32.mrb[0].mxu0
      %v636 = vadd.f32 0.0, %v635
      %v637 = vpop.f32.mrb[0].mxu0
      %v638 = vpop.f32.mrb[0].mxu0
      %v639 = vadd.f32 0.0, %v638
      %v640 = vpop.f32.mrb[0].mxu0
      %641 = vmatprep.mubr.bf16.mxu0 0
      %642 = vmatmul.mubr.bf16.gmra.mrb[0].mxu0 %v585
      %v643 = vpop.f32.mrb[0].mxu0
      %v644 = vadd.f32 0.0, %v643
      %v645 = vpop.f32.mrb[0].mxu0
      %v646 = vpop.f32.mrb[0].mxu0
      %v647 = vadd.f32 0.0, %v646
      %v648 = vpop.f32.mrb[0].mxu0
      %649 = vmatprep.mubr.bf16.mxu0 0
      %650 = vmatmul.mubr.bf16.gmra.mrb[0].mxu0 %v588
      %v651 = vpop.f32.mrb[0].mxu0
      %v652 = vadd.f32 0.0, %v651
      %v653 = vpop.f32.mrb[0].mxu0
      %v654 = vpop.f32.mrb[0].mxu0
      %v655 = vadd.f32 0.0, %v654
      %v656 = vpop.f32.mrb[0].mxu0
      %657 = vdwg.mxu0
      %v658 = vld [vmem:[#allocation4] sm:$0xff]
      %v659 = vld [vmem:[#allocation4 + $0x8] sm:$0xff]
      %v660 = vld [vmem:[#allocation4 + $0x10] sm:$0xff]
      %v661 = vld [vmem:[#allocation4 + $0x18] sm:$0xff]
      %v662 = vld [vmem:[#allocation4 + $0x20] sm:$0xff]
      %v663 = vld [vmem:[#allocation4 + $0x28] sm:$0xff]
      %v664 = vld [vmem:[#allocation4 + $0x30] sm:$0xff]
      %v665 = vld [vmem:[#allocation4 + $0x38] sm:$0xff]
      %v666 = vadd.f32 %v658, %v628
      %v667 = vadd.f32 %v659, %v631
      %v668 = vadd.f32 %v660, %v636
      %v669 = vadd.f32 %v661, %v639
      %v670 = vadd.f32 %v662, %v644
      %v671 = vadd.f32 %v663, %v647
      %v672 = vadd.f32 %v664, %v652
      %v673 = vadd.f32 %v665, %v655
      %674 = vst.msk [vmem:[#allocation4] sm:$0xff] %vm549, %v666
      %675 = vst.msk [vmem:[#allocation4 + $0x8] sm:$0xff] %vm549, %v667
      %676 = vst.msk [vmem:[#allocation4 + $0x10] sm:$0xff] %vm549, %v668
      %677 = vst.msk [vmem:[#allocation4 + $0x18] sm:$0xff] %vm549, %v669
      %678 = vst.msk [vmem:[#allocation4 + $0x20] sm:$0xff] %vm549, %v670
      %679 = vst.msk [vmem:[#allocation4 + $0x28] sm:$0xff] %vm549, %v671
      %680 = vst.msk [vmem:[#allocation4 + $0x30] sm:$0xff] %vm549, %v672
      %681 = vst.msk [vmem:[#allocation4 + $0x38] sm:$0xff] %vm549, %v673
      %s682 = scalar_lea.vmem [#allocation2], 16
      %v683 = vld [vmem:[%s682] sm:$0xff]
      %v684 = vld [vmem:[%s682 + $0x8] sm:$0xff]
      %v685 = vld [vmem:[%s682 + $0x10] sm:$0xff]
      %v686 = vld [vmem:[%s682 + $0x18] sm:$0xff]
      %v687 = vld [vmem:[%s682 + $0x20] sm:$0xff]
      %v688 = vld [vmem:[%s682 + $0x28] sm:$0xff]
      %v689 = vld [vmem:[%s682 + $0x30] sm:$0xff]
      %v690 = vld [vmem:[%s682 + $0x38] sm:$0xff]
      %v691 = vpack.c.bf16 %v684, %v683
      %v692 = vpack.c.bf16 %v686, %v685
      %v693 = vpack.c.bf16 %v688, %v687
      %v694 = vpack.c.bf16 %v690, %v689
      %s695 = scalar_lea.vmem %s1, 16
      %v696 = vld [vmem:[%s695] sm:$0xf]
      %v697 = vld [vmem:[%s695 + $0x4] sm:$0x3]
      %v700 = vunpack.c.l.b16 %v696
      %v701 = vunpack.c.l.b16 %v697
      %v702 = vpack.c.b16 %v701, %v700
      %v704 = vsel %vm339, %v691, 0
      %v707 = vsel %vm339, %v692, 0
      %v710 = vsel %vm339, %v693, 0
      %v713 = vsel %vm339, %v694, 0
      %v716 = vsel %vm480, %v702, 0
      %718 = vmatprep.subr.bf16.mxu0 0
      %719 = vmatpush1.bf16.msra.mxu0 %v716
      %720 = vmatprep.subr.bf16.mxu0 0
      %721 = vmatpush1.bf16.msra.mxu0 0
      %722 = vmatprep.subr.bf16.mxu0 0
      %723 = vmatpush1.bf16.msra.mxu0 0
      %724 = vmatprep.subr.bf16.mxu0 0
      %725 = vmatpush1.bf16.msra.mxu0 0
      %726 = vmatprep.subr.bf16.mxu0 0
      %727 = vmatpush1.bf16.msra.mxu0 0
      %728 = vmatprep.subr.bf16.mxu0 0
      %729 = vmatpush1.bf16.msra.mxu0 0
      %730 = vmatprep.subr.bf16.mxu0 0
      %731 = vmatpush1.bf16.msra.mxu0 0
      %732 = vmatprep.subr.bf16.mxu0 0
      %733 = vmatpush1.bf16.msra.mxu0 0
      %734 = vmatprep.subr.bf16.mxu0 0
      %735 = vmatpush1.bf16.msra.mxu0 0
      %736 = vmatprep.subr.bf16.mxu0 0
      %737 = vmatpush1.bf16.msra.mxu0 0
      %738 = vmatprep.subr.bf16.mxu0 0
      %739 = vmatpush1.bf16.msra.mxu0 0
      %740 = vmatprep.subr.bf16.mxu0 0
      %741 = vmatpush1.bf16.msra.mxu0 0
      %742 = vmatprep.subr.bf16.mxu0 0
      %743 = vmatpush1.bf16.msra.mxu0 0
      %744 = vmatprep.subr.bf16.mxu0 0
      %745 = vmatpush1.bf16.msra.mxu0 0
      %746 = vmatprep.subr.bf16.mxu0 0
      %747 = vmatpush1.bf16.msra.mxu0 0
      %748 = vmatprep.subr.bf16.mxu0 0
      %749 = vmatpush1.bf16.msra.mxu0 0
      %750 = vmatprep.mubr.bf16.mxu0 0
      %751 = vmatmul.mubr.bf16.gmra.mrb[0].mxu0 %v704
      %v752 = vpop.f32.mrb[0].mxu0
      %v753 = vadd.f32 0.0, %v752
      %v754 = vpop.f32.mrb[0].mxu0
      %v755 = vpop.f32.mrb[0].mxu0
      %v756 = vadd.f32 0.0, %v755
      %v757 = vpop.f32.mrb[0].mxu0
      %758 = vmatprep.mubr.bf16.mxu0 0
      %759 = vmatmul.mubr.bf16.gmra.mrb[0].mxu0 %v707
      %v760 = vpop.f32.mrb[0].mxu0
      %v761 = vadd.f32 0.0, %v760
      %v762 = vpop.f32.mrb[0].mxu0
      %v763 = vpop.f32.mrb[0].mxu0
      %v764 = vadd.f32 0.0, %v763
      %v765 = vpop.f32.mrb[0].mxu0
      %766 = vmatprep.mubr.bf16.mxu0 0
      %767 = vmatmul.mubr.bf16.gmra.mrb[0].mxu0 %v710
      %v768 = vpop.f32.mrb[0].mxu0
      %v769 = vadd.f32 0.0, %v768
      %v770 = vpop.f32.mrb[0].mxu0
      %v771 = vpop.f32.mrb[0].mxu0
      %v772 = vadd.f32 0.0, %v771
      %v773 = vpop.f32.mrb[0].mxu0
      %774 = vmatprep.mubr.bf16.mxu0 0
      %775 = vmatmul.mubr.bf16.gmra.mrb[0].mxu0 %v713
      %v776 = vpop.f32.mrb[0].mxu0
      %v777 = vadd.f32 0.0, %v776
      %v778 = vpop.f32.mrb[0].mxu0
      %v779 = vpop.f32.mrb[0].mxu0
      %v780 = vadd.f32 0.0, %v779
      %v781 = vpop.f32.mrb[0].mxu0
      %782 = vdwg.mxu0
      %v783 = vld [vmem:[#allocation4] sm:$0xff]
      %v784 = vld [vmem:[#allocation4 + $0x8] sm:$0xff]
      %v785 = vld [vmem:[#allocation4 + $0x10] sm:$0xff]
      %v786 = vld [vmem:[#allocation4 + $0x18] sm:$0xff]
      %v787 = vld [vmem:[#allocation4 + $0x20] sm:$0xff]
      %v788 = vld [vmem:[#allocation4 + $0x28] sm:$0xff]
      %v789 = vld [vmem:[#allocation4 + $0x30] sm:$0xff]
      %v790 = vld [vmem:[#allocation4 + $0x38] sm:$0xff]
      %v791 = vadd.f32 %v783, %v753
      %v792 = vadd.f32 %v784, %v756
      %v793 = vadd.f32 %v785, %v761
      %v794 = vadd.f32 %v786, %v764
      %v795 = vadd.f32 %v787, %v769
      %v796 = vadd.f32 %v788, %v772
      %v797 = vadd.f32 %v789, %v777
      %v798 = vadd.f32 %v790, %v780
      %799 = vst.msk [vmem:[#allocation4] sm:$0xff] %vm549, %v791
      %800 = vst.msk [vmem:[#allocation4 + $0x8] sm:$0xff] %vm549, %v792
      %801 = vst.msk [vmem:[#allocation4 + $0x10] sm:$0xff] %vm549, %v793
      %802 = vst.msk [vmem:[#allocation4 + $0x18] sm:$0xff] %vm549, %v794
      %803 = vst.msk [vmem:[#allocation4 + $0x20] sm:$0xff] %vm549, %v795
      %804 = vst.msk [vmem:[#allocation4 + $0x28] sm:$0xff] %vm549, %v796
      %805 = vst.msk [vmem:[#allocation4 + $0x30] sm:$0xff] %vm549, %v797
      %806 = vst.msk [vmem:[#allocation4 + $0x38] sm:$0xff] %vm549, %v798
      %v807 = vld [vmem:[#allocation4] sm:$0xff]
      %v808 = vld [vmem:[#allocation4 + $0x8] sm:$0xff]
      %v809 = vld [vmem:[#allocation4 + $0x10] sm:$0xff]
      %v810 = vld [vmem:[#allocation4 + $0x18] sm:$0xff]
      %v811 = vld [vmem:[#allocation4 + $0x20] sm:$0xff]
      %v812 = vld [vmem:[#allocation4 + $0x28] sm:$0xff]
      %v813 = vld [vmem:[#allocation4 + $0x30] sm:$0xff]
      %v814 = vld [vmem:[#allocation4 + $0x38] sm:$0xff]
      %v815 = vld [vmem:[%s2] sm:$0x1]
      %v817 = vlaneseq
      %v818 = vshrl.u32 %v817, 7
      %v819 = vsub.s32 0, %v818
      %v820 = vrot.slane %v815, %v819
      %v822 = vmul.f32 %v807, %v820
      %v823 = vmul.f32 %v808, %v820
      %v824 = vmul.f32 %v809, %v820
      %v825 = vmul.f32 %v810, %v820
      %v826 = vmul.f32 %v811, %v820
      %v827 = vmul.f32 %v812, %v820
      %v828 = vmul.f32 %v813, %v820
      %v829 = vmul.f32 %v814, %v820
      %v830 = vld [vmem:[%s3] sm:$0x1]
      %v832 = vlaneseq
      %v833 = vshrl.u32 %v832, 7
      %v834 = vsub.s32 0, %v833
      %v835 = vrot.slane %v830, %v834
      %v837 = vadd.f32 %v822, %v835
      %v838 = vadd.f32 %v823, %v835
      %v839 = vadd.f32 %v824, %v835
      %v840 = vadd.f32 %v825, %v835
      %v841 = vadd.f32 %v826, %v835
      %v842 = vadd.f32 %v827, %v835
      %v843 = vadd.f32 %v828, %v835
      %v844 = vadd.f32 %v829, %v835
      %v845 = vmax.f32 %v837, 0.0
      %v846 = vmax.f32 %v838, 0.0
      %v847 = vmax.f32 %v839, 0.0
      %v848 = vmax.f32 %v840, 0.0
      %v849 = vmax.f32 %v841, 0.0
      %v850 = vmax.f32 %v842, 0.0
      %v851 = vmax.f32 %v843, 0.0
      %v852 = vmax.f32 %v844, 0.0
      %vm853 = vcmask 195584
      %854 = vst.msk [vmem:[#allocation3] sm:$0xff] %vm853, 0.0
      %s855 = scalar_lea.vmem [#allocation3], 72
      %856 = vst.msk [vmem:[%s855] sm:$0xff] %vm853, 0.0
      %vm857 = vcmask 57344
      %858 = vst.msk [vmem:[#allocation3] sm:$0x1] %vm857, 0.0
      %859 = vst.msk [vmem:[#allocation3 + $0x8] sm:$0x1] %vm857, 0.0
      %860 = vst.msk [vmem:[#allocation3 + $0x10] sm:$0x1] %vm857, 0.0
      %861 = vst.msk [vmem:[#allocation3 + $0x18] sm:$0x1] %vm857, 0.0
      %862 = vst.msk [vmem:[#allocation3 + $0x20] sm:$0x1] %vm857, 0.0
      %863 = vst.msk [vmem:[#allocation3 + $0x28] sm:$0x1] %vm857, 0.0
      %864 = vst.msk [vmem:[#allocation3 + $0x30] sm:$0x1] %vm857, 0.0
      %865 = vst.msk [vmem:[#allocation3 + $0x38] sm:$0x1] %vm857, 0.0
      %866 = vst.msk [vmem:[#allocation3 + $0x40] sm:$0x1] %vm857, 0.0
      %867 = vst.msk [vmem:[#allocation3 + $0x48] sm:$0x1] %vm857, 0.0
      %vm868 = vcmask 188544
      %869 = vst.msk [vmem:[#allocation3 + $0x7] sm:$0x1] %vm868, 0.0
      %870 = vst.msk [vmem:[#allocation3 + $0xf] sm:$0x1] %vm868, 0.0
      %871 = vst.msk [vmem:[#allocation3 + $0x17] sm:$0x1] %vm868, 0.0
      %872 = vst.msk [vmem:[#allocation3 + $0x1f] sm:$0x1] %vm868, 0.0
      %873 = vst.msk [vmem:[#allocation3 + $0x27] sm:$0x1] %vm868, 0.0
      %874 = vst.msk [vmem:[#allocation3 + $0x2f] sm:$0x1] %vm868, 0.0
      %875 = vst.msk [vmem:[#allocation3 + $0x37] sm:$0x1] %vm868, 0.0
      %876 = vst.msk [vmem:[#allocation3 + $0x3f] sm:$0x1] %vm868, 0.0
      %877 = vst.msk [vmem:[#allocation3 + $0x47] sm:$0x1] %vm868, 0.0
      %878 = vst.msk [vmem:[#allocation3 + $0x4f] sm:$0x1] %vm868, 0.0
      %887 = vrot.lane.b32.xlu0 %v845, 8
      %v888 = vpop.permute.xlu0 %887
      %889 = vrot.lane.b32.xlu0 %v846, 8
      %v890 = vpop.permute.xlu0 %889
      %891 = vrot.lane.b32.xlu0 %v847, 8
      %v892 = vpop.permute.xlu0 %891
      %893 = vrot.lane.b32.xlu0 %v848, 8
      %v894 = vpop.permute.xlu0 %893
      %895 = vrot.lane.b32.xlu0 %v849, 8
      %v896 = vpop.permute.xlu0 %895
      %897 = vrot.lane.b32.xlu0 %v850, 8
      %v898 = vpop.permute.xlu0 %897
      %899 = vrot.lane.b32.xlu0 %v851, 8
      %v900 = vpop.permute.xlu0 %899
      %901 = vrot.lane.b32.xlu0 %v852, 8
      %v902 = vpop.permute.xlu0 %901
      %s911 = scalar_lea.vmem [#allocation3], 8
      %vm912 = vcmask 130112
      %913 = vst.msk [vmem:[%s911] sm:$0xff] %vm912, %v888
      %914 = vst.msk [vmem:[%s911 + $0x8] sm:$0xff] %vm912, %v890
      %915 = vst.msk [vmem:[%s911 + $0x10] sm:$0xff] %vm912, %v892
      %916 = vst.msk [vmem:[%s911 + $0x18] sm:$0xff] %vm912, %v894
      %917 = vst.msk [vmem:[%s911 + $0x20] sm:$0xff] %vm912, %v896
      %918 = vst.msk [vmem:[%s911 + $0x28] sm:$0xff] %vm912, %v898
      %919 = vst.msk [vmem:[%s911 + $0x30] sm:$0xff] %vm912, %v900
      %920 = vst.msk [vmem:[%s911 + $0x38] sm:$0xff] %vm912, %v902
      %vm921 = vcmask 63488
      %922 = vst.msk [vmem:[%s911 + $0x1] sm:$0x7f] %vm921, %v845
      %923 = vst.msk [vmem:[%s911 + $0x9] sm:$0x7f] %vm921, %v846
      %924 = vst.msk [vmem:[%s911 + $0x11] sm:$0x7f] %vm921, %v847
      %925 = vst.msk [vmem:[%s911 + $0x19] sm:$0x7f] %vm921, %v848
      %926 = vst.msk [vmem:[%s911 + $0x21] sm:$0x7f] %vm921, %v849
      %927 = vst.msk [vmem:[%s911 + $0x29] sm:$0x7f] %vm921, %v850
      %928 = vst.msk [vmem:[%s911 + $0x31] sm:$0x7f] %vm921, %v851
      %929 = vst.msk [vmem:[%s911 + $0x39] sm:$0x7f] %vm921, %v852
      %930 = vrot.lane.b32.xlu0 %v845, 16
      %v931 = vpop.permute.xlu0 %930
      %932 = vrot.lane.b32.xlu0 %v846, 16
      %v933 = vpop.permute.xlu0 %932
      %934 = vrot.lane.b32.xlu0 %v847, 16
      %v935 = vpop.permute.xlu0 %934
      %936 = vrot.lane.b32.xlu0 %v848, 16
      %v937 = vpop.permute.xlu0 %936
      %938 = vrot.lane.b32.xlu0 %v849, 16
      %v939 = vpop.permute.xlu0 %938
      %940 = vrot.lane.b32.xlu0 %v850, 16
      %v941 = vpop.permute.xlu0 %940
      %942 = vrot.lane.b32.xlu0 %v851, 16
      %v943 = vpop.permute.xlu0 %942
      %944 = vrot.lane.b32.xlu0 %v852, 16
      %v945 = vpop.permute.xlu0 %944
      %vm954 = vcmask 195713
      %955 = vst.msk [vmem:[%s911 - $0x1] sm:$0xfe] %vm954, %v931
      %956 = vst.msk [vmem:[%s911 + $0x7] sm:$0xfe] %vm954, %v933
      %957 = vst.msk [vmem:[%s911 + $0xf] sm:$0xfe] %vm954, %v935
      %958 = vst.msk [vmem:[%s911 + $0x17] sm:$0xfe] %vm954, %v937
      %959 = vst.msk [vmem:[%s911 + $0x1f] sm:$0xfe] %vm954, %v939
      %960 = vst.msk [vmem:[%s911 + $0x27] sm:$0xfe] %vm954, %v941
      %961 = vst.msk [vmem:[%s911 + $0x2f] sm:$0xfe] %vm954, %v943
      %962 = vst.msk [vmem:[%s911 + $0x37] sm:$0xfe] %vm954, %v945
      %v963 = vld [vmem:[#allocation3] sm:$0xff]
      %v964 = vld [vmem:[#allocation3 + $0x8] sm:$0xff]
      %v965 = vld [vmem:[#allocation3 + $0x10] sm:$0xff]
      %v966 = vld [vmem:[#allocation3 + $0x18] sm:$0xff]
      %v967 = vld [vmem:[#allocation3 + $0x20] sm:$0xff]
      %v968 = vld [vmem:[#allocation3 + $0x28] sm:$0xff]
      %v969 = vld [vmem:[#allocation3 + $0x30] sm:$0xff]
      %v970 = vld [vmem:[#allocation3 + $0x38] sm:$0xff]
      %v971 = vpack.c.bf16 %v964, %v963
      %v972 = vpack.c.bf16 %v966, %v965
      %v973 = vpack.c.bf16 %v968, %v967
      %v974 = vpack.c.bf16 %v970, %v969
      %v975 = vld [vmem:[%s4] sm:$0xf]
      %v976 = vld [vmem:[%s4 + $0x4] sm:$0xf]
      %v977 = vld [vmem:[%s4 + $0x8] sm:$0xf]
      %v981 = vunpack.c.l.b16 %v975
      %v982 = vunpack.c.l.b16 %v976
      %v983 = vunpack.c.l.b16 %v977
      %v984 = vpack.c.b16 %v982, %v981
      %v985 = vpack.c.b16 %v983, %v983
      %v988 = vsel %vm853, %v971, 0
      %v991 = vsel %vm853, %v972, 0
      %v994 = vsel %vm853, %v973, 0
      %v997 = vsel %vm853, %v974, 0
      %vm999 = vcmask 1043456
      %v1001 = vsel %vm999, %v985, 0
      %1003 = vmatprep.subr.bf16.mxu0 0
      %1004 = vmatpush1.bf16.msra.mxu0 %v984
      %1005 = vmatprep.subr.bf16.mxu0 0
      %1006 = vmatpush1.bf16.msra.mxu0 %v1001
      %1007 = vmatprep.subr.bf16.mxu0 0
      %1008 = vmatpush1.bf16.msra.mxu0 0
      %1009 = vmatprep.subr.bf16.mxu0 0
      %1010 = vmatpush1.bf16.msra.mxu0 0
      %1011 = vmatprep.subr.bf16.mxu0 0
      %1012 = vmatpush1.bf16.msra.mxu0 0
      %1013 = vmatprep.subr.bf16.mxu0 0
      %1014 = vmatpush1.bf16.msra.mxu0 0
      %1015 = vmatprep.subr.bf16.mxu0 0
      %1016 = vmatpush1.bf16.msra.mxu0 0
      %1017 = vmatprep.subr.bf16.mxu0 0
      %1018 = vmatpush1.bf16.msra.mxu0 0
      %1019 = vmatprep.subr.bf16.mxu0 0
      %1020 = vmatpush1.bf16.msra.mxu0 0
      %1021 = vmatprep.subr.bf16.mxu0 0
      %1022 = vmatpush1.bf16.msra.mxu0 0
      %1023 = vmatprep.subr.bf16.mxu0 0
      %1024 = vmatpush1.bf16.msra.mxu0 0
      %1025 = vmatprep.subr.bf16.mxu0 0
      %1026 = vmatpush1.bf16.msra.mxu0 0
      %1027 = vmatprep.subr.bf16.mxu0 0
      %1028 = vmatpush1.bf16.msra.mxu0 0
      %1029 = vmatprep.subr.bf16.mxu0 0
      %1030 = vmatpush1.bf16.msra.mxu0 0
      %1031 = vmatprep.subr.bf16.mxu0 0
      %1032 = vmatpush1.bf16.msra.mxu0 0
      %1033 = vmatprep.subr.bf16.mxu0 0
      %1034 = vmatpush1.bf16.msra.mxu0 0
      %1035 = vmatprep.mubr.bf16.mxu0 0
      %1036 = vmatmul.mubr.bf16.gmra.mrb[0].mxu0 %v988
      %v1037 = vpop.f32.mrb[0].mxu0
      %v1038 = vadd.f32 0.0, %v1037
      %v1039 = vpop.f32.mrb[0].mxu0
      %v1040 = vpop.f32.mrb[0].mxu0
      %v1041 = vadd.f32 0.0, %v1040
      %v1042 = vpop.f32.mrb[0].mxu0
      %1043 = vmatprep.mubr.bf16.mxu0 0
      %1044 = vmatmul.mubr.bf16.gmra.mrb[0].mxu0 %v991
      %v1045 = vpop.f32.mrb[0].mxu0
      %v1046 = vadd.f32 0.0, %v1045
      %v1047 = vpop.f32.mrb[0].mxu0
      %v1048 = vpop.f32.mrb[0].mxu0
      %v1049 = vadd.f32 0.0, %v1048
      %v1050 = vpop.f32.mrb[0].mxu0
      %1051 = vmatprep.mubr.bf16.mxu0 0
      %1052 = vmatmul.mubr.bf16.gmra.mrb[0].mxu0 %v994
      %v1053 = vpop.f32.mrb[0].mxu0
      %v1054 = vadd.f32 0.0, %v1053
      %v1055 = vpop.f32.mrb[0].mxu0
      %v1056 = vpop.f32.mrb[0].mxu0
      %v1057 = vadd.f32 0.0, %v1056
      %v1058 = vpop.f32.mrb[0].mxu0
      %1059 = vmatprep.mubr.bf16.mxu0 0
      %1060 = vmatmul.mubr.bf16.gmra.mrb[0].mxu0 %v997
      %v1061 = vpop.f32.mrb[0].mxu0
      %v1062 = vadd.f32 0.0, %v1061
      %v1063 = vpop.f32.mrb[0].mxu0
      %v1064 = vpop.f32.mrb[0].mxu0
      %v1065 = vadd.f32 0.0, %v1064
      %v1066 = vpop.f32.mrb[0].mxu0
      %1067 = vdwg.mxu0
      %1068 = vst.msk [vmem:[#allocation5] sm:$0xff] %vm549, %v1038
      %1069 = vst.msk [vmem:[#allocation5 + $0x8] sm:$0xff] %vm549, %v1041
      %1070 = vst.msk [vmem:[#allocation5 + $0x10] sm:$0xff] %vm549, %v1046
      %1071 = vst.msk [vmem:[#allocation5 + $0x18] sm:$0xff] %vm549, %v1049
      %1072 = vst.msk [vmem:[#allocation5 + $0x20] sm:$0xff] %vm549, %v1054
      %1073 = vst.msk [vmem:[#allocation5 + $0x28] sm:$0xff] %vm549, %v1057
      %1074 = vst.msk [vmem:[#allocation5 + $0x30] sm:$0xff] %vm549, %v1062
      %1075 = vst.msk [vmem:[#allocation5 + $0x38] sm:$0xff] %vm549, %v1065
      %v1076 = vld [vmem:[%s911] sm:$0xff]
      %v1077 = vld [vmem:[%s911 + $0x8] sm:$0xff]
      %v1078 = vld [vmem:[%s911 + $0x10] sm:$0xff]
      %v1079 = vld [vmem:[%s911 + $0x18] sm:$0xff]
      %v1080 = vld [vmem:[%s911 + $0x20] sm:$0xff]
      %v1081 = vld [vmem:[%s911 + $0x28] sm:$0xff]
      %v1082 = vld [vmem:[%s911 + $0x30] sm:$0xff]
      %v1083 = vld [vmem:[%s911 + $0x38] sm:$0xff]
      %v1084 = vpack.c.bf16 %v1077, %v1076
      %v1085 = vpack.c.bf16 %v1079, %v1078
      %v1086 = vpack.c.bf16 %v1081, %v1080
      %v1087 = vpack.c.bf16 %v1083, %v1082
      %s1088 = scalar_lea.vmem %s4, 12
      %v1089 = vld [vmem:[%s1088] sm:$0xf]
      %v1090 = vld [vmem:[%s1088 + $0x4] sm:$0xf]
      %v1091 = vld [vmem:[%s1088 + $0x8] sm:$0xf]
      %v1095 = vunpack.c.l.b16 %v1089
      %v1096 = vunpack.c.l.b16 %v1090
      %v1097 = vunpack.c.l.b16 %v1091
      %v1098 = vpack.c.b16 %v1096, %v1095
      %v1099 = vpack.c.b16 %v1097, %v1097
      %v1102 = vsel %vm853, %v1084, 0
      %v1105 = vsel %vm853, %v1085, 0
      %v1108 = vsel %vm853, %v1086, 0
      %v1111 = vsel %vm853, %v1087, 0
      %v1114 = vsel %vm999, %v1099, 0
      %1116 = vmatprep.subr.bf16.mxu0 0
      %1117 = vmatpush1.bf16.msra.mxu0 %v1098
      %1118 = vmatprep.subr.bf16.mxu0 0
      %1119 = vmatpush1.bf16.msra.mxu0 %v1114
      %1120 = vmatprep.subr.bf16.mxu0 0
      %1121 = vmatpush1.bf16.msra.mxu0 0
      %1122 = vmatprep.subr.bf16.mxu0 0
      %1123 = vmatpush1.bf16.msra.mxu0 0
      %1124 = vmatprep.subr.bf16.mxu0 0
      %1125 = vmatpush1.bf16.msra.mxu0 0
      %1126 = vmatprep.subr.bf16.mxu0 0
      %1127 = vmatpush1.bf16.msra.mxu0 0
      %1128 = vmatprep.subr.bf16.mxu0 0
      %1129 = vmatpush1.bf16.msra.mxu0 0
      %1130 = vmatprep.subr.bf16.mxu0 0
      %1131 = vmatpush1.bf16.msra.mxu0 0
      %1132 = vmatprep.subr.bf16.mxu0 0
      %1133 = vmatpush1.bf16.msra.mxu0 0
      %1134 = vmatprep.subr.bf16.mxu0 0
      %1135 = vmatpush1.bf16.msra.mxu0 0
      %1136 = vmatprep.subr.bf16.mxu0 0
      %1137 = vmatpush1.bf16.msra.mxu0 0
      %1138 = vmatprep.subr.bf16.mxu0 0
      %1139 = vmatpush1.bf16.msra.mxu0 0
      %1140 = vmatprep.subr.bf16.mxu0 0
      %1141 = vmatpush1.bf16.msra.mxu0 0
      %1142 = vmatprep.subr.bf16.mxu0 0
      %1143 = vmatpush1.bf16.msra.mxu0 0
      %1144 = vmatprep.subr.bf16.mxu0 0
      %1145 = vmatpush1.bf16.msra.mxu0 0
      %1146 = vmatprep.subr.bf16.mxu0 0
      %1147 = vmatpush1.bf16.msra.mxu0 0
      %1148 = vmatprep.mubr.bf16.mxu0 0
      %1149 = vmatmul.mubr.bf16.gmra.mrb[0].mxu0 %v1102
      %v1150 = vpop.f32.mrb[0].mxu0
      %v1151 = vadd.f32 0.0, %v1150
      %v1152 = vpop.f32.mrb[0].mxu0
      %v1153 = vpop.f32.mrb[0].mxu0
      %v1154 = vadd.f32 0.0, %v1153
      %v1155 = vpop.f32.mrb[0].mxu0
      %1156 = vmatprep.mubr.bf16.mxu0 0
      %1157 = vmatmul.mubr.bf16.gmra.mrb[0].mxu0 %v1105
      %v1158 = vpop.f32.mrb[0].mxu0
      %v1159 = vadd.f32 0.0, %v1158
      %v1160 = vpop.f32.mrb[0].mxu0
      %v1161 = vpop.f32.mrb[0].mxu0
      %v1162 = vadd.f32 0.0, %v1161
      %v1163 = vpop.f32.mrb[0].mxu0
      %1164 = vmatprep.mubr.bf16.mxu0 0
      %1165 = vmatmul.mubr.bf16.gmra.mrb[0].mxu0 %v1108
      %v1166 = vpop.f32.mrb[0].mxu0
      %v1167 = vadd.f32 0.0, %v1166
      %v1168 = vpop.f32.mrb[0].mxu0
      %v1169 = vpop.f32.mrb[0].mxu0
      %v1170 = vadd.f32 0.0, %v1169
      %v1171 = vpop.f32.mrb[0].mxu0
      %1172 = vmatprep.mubr.bf16.mxu0 0
      %1173 = vmatmul.mubr.bf16.gmra.mrb[0].mxu0 %v1111
      %v1174 = vpop.f32.mrb[0].mxu0
      %v1175 = vadd.f32 0.0, %v1174
      %v1176 = vpop.f32.mrb[0].mxu0
      %v1177 = vpop.f32.mrb[0].mxu0
      %v1178 = vadd.f32 0.0, %v1177
      %v1179 = vpop.f32.mrb[0].mxu0
      %1180 = vdwg.mxu0
      %v1181 = vld [vmem:[#allocation5] sm:$0xff]
      %v1182 = vld [vmem:[#allocation5 + $0x8] sm:$0xff]
      %v1183 = vld [vmem:[#allocation5 + $0x10] sm:$0xff]
      %v1184 = vld [vmem:[#allocation5 + $0x18] sm:$0xff]
      %v1185 = vld [vmem:[#allocation5 + $0x20] sm:$0xff]
      %v1186 = vld [vmem:[#allocation5 + $0x28] sm:$0xff]
      %v1187 = vld [vmem:[#allocation5 + $0x30] sm:$0xff]
      %v1188 = vld [vmem:[#allocation5 + $0x38] sm:$0xff]
      %v1189 = vadd.f32 %v1181, %v1151
      %v1190 = vadd.f32 %v1182, %v1154
      %v1191 = vadd.f32 %v1183, %v1159
      %v1192 = vadd.f32 %v1184, %v1162
      %v1193 = vadd.f32 %v1185, %v1167
      %v1194 = vadd.f32 %v1186, %v1170
      %v1195 = vadd.f32 %v1187, %v1175
      %v1196 = vadd.f32 %v1188, %v1178
      %1197 = vst.msk [vmem:[#allocation5] sm:$0xff] %vm549, %v1189
      %1198 = vst.msk [vmem:[#allocation5 + $0x8] sm:$0xff] %vm549, %v1190
      %1199 = vst.msk [vmem:[#allocation5 + $0x10] sm:$0xff] %vm549, %v1191
      %1200 = vst.msk [vmem:[#allocation5 + $0x18] sm:$0xff] %vm549, %v1192
      %1201 = vst.msk [vmem:[#allocation5 + $0x20] sm:$0xff] %vm549, %v1193
      %1202 = vst.msk [vmem:[#allocation5 + $0x28] sm:$0xff] %vm549, %v1194
      %1203 = vst.msk [vmem:[#allocation5 + $0x30] sm:$0xff] %vm549, %v1195
      %1204 = vst.msk [vmem:[#allocation5 + $0x38] sm:$0xff] %vm549, %v1196
      %s1205 = scalar_lea.vmem [#allocation3], 16
      %v1206 = vld [vmem:[%s1205] sm:$0xff]
      %v1207 = vld [vmem:[%s1205 + $0x8] sm:$0xff]
      %v1208 = vld [vmem:[%s1205 + $0x10] sm:$0xff]
      %v1209 = vld [vmem:[%s1205 + $0x18] sm:$0xff]
      %v1210 = vld [vmem:[%s1205 + $0x20] sm:$0xff]
      %v1211 = vld [vmem:[%s1205 + $0x28] sm:$0xff]
      %v1212 = vld [vmem:[%s1205 + $0x30] sm:$0xff]
      %v1213 = vld [vmem:[%s1205 + $0x38] sm:$0xff]
      %v1214 = vpack.c.bf16 %v1207, %v1206
      %v1215 = vpack.c.bf16 %v1209, %v1208
      %v1216 = vpack.c.bf16 %v1211, %v1210
      %v1217 = vpack.c.bf16 %v1213, %v1212
      %s1218 = scalar_lea.vmem %s4, 24
      %v1219 = vld [vmem:[%s1218] sm:$0xf]
      %v1220 = vld [vmem:[%s1218 + $0x4] sm:$0xf]
      %v1221 = vld [vmem:[%s1218 + $0x8] sm:$0xf]
      %v1225 = vunpack.c.l.b16 %v1219
      %v1226 = vunpack.c.l.b16 %v1220
      %v1227 = vunpack.c.l.b16 %v1221
      %v1228 = vpack.c.b16 %v1226, %v1225
      %v1229 = vpack.c.b16 %v1227, %v1227
      %v1232 = vsel %vm853, %v1214, 0
      %v1235 = vsel %vm853, %v1215, 0
      %v1238 = vsel %vm853, %v1216, 0
      %v1241 = vsel %vm853, %v1217, 0
      %v1244 = vsel %vm999, %v1229, 0
      %1246 = vmatprep.subr.bf16.mxu0 0
      %1247 = vmatpush1.bf16.msra.mxu0 %v1228
      %1248 = vmatprep.subr.bf16.mxu0 0
      %1249 = vmatpush1.bf16.msra.mxu0 %v1244
      %1250 = vmatprep.subr.bf16.mxu0 0
      %1251 = vmatpush1.bf16.msra.mxu0 0
      %1252 = vmatprep.subr.bf16.mxu0 0
      %1253 = vmatpush1.bf16.msra.mxu0 0
      %1254 = vmatprep.subr.bf16.mxu0 0
      %1255 = vmatpush1.bf16.msra.mxu0 0
      %1256 = vmatprep.subr.bf16.mxu0 0
      %1257 = vmatpush1.bf16.msra.mxu0 0
      %1258 = vmatprep.subr.bf16.mxu0 0
      %1259 = vmatpush1.bf16.msra.mxu0 0
      %1260 = vmatprep.subr.bf16.mxu0 0
      %1261 = vmatpush1.bf16.msra.mxu0 0
      %1262 = vmatprep.subr.bf16.mxu0 0
      %1263 = vmatpush1.bf16.msra.mxu0 0
      %1264 = vmatprep.subr.bf16.mxu0 0
      %1265 = vmatpush1.bf16.msra.mxu0 0
      %1266 = vmatprep.subr.bf16.mxu0 0
      %1267 = vmatpush1.bf16.msra.mxu0 0
      %1268 = vmatprep.subr.bf16.mxu0 0
      %1269 = vmatpush1.bf16.msra.mxu0 0
      %1270 = vmatprep.subr.bf16.mxu0 0
      %1271 = vmatpush1.bf16.msra.mxu0 0
      %1272 = vmatprep.subr.bf16.mxu0 0
      %1273 = vmatpush1.bf16.msra.mxu0 0
      %1274 = vmatprep.subr.bf16.mxu0 0
      %1275 = vmatpush1.bf16.msra.mxu0 0
      %1276 = vmatprep.subr.bf16.mxu0 0
      %1277 = vmatpush1.bf16.msra.mxu0 0
      %1278 = vmatprep.mubr.bf16.mxu0 0
      %1279 = vmatmul.mubr.bf16.gmra.mrb[0].mxu0 %v1232
      %v1280 = vpop.f32.mrb[0].mxu0
      %v1281 = vadd.f32 0.0, %v1280
      %v1282 = vpop.f32.mrb[0].mxu0
      %v1283 = vpop.f32.mrb[0].mxu0
      %v1284 = vadd.f32 0.0, %v1283
      %v1285 = vpop.f32.mrb[0].mxu0
      %1286 = vmatprep.mubr.bf16.mxu0 0
      %1287 = vmatmul.mubr.bf16.gmra.mrb[0].mxu0 %v1235
      %v1288 = vpop.f32.mrb[0].mxu0
      %v1289 = vadd.f32 0.0, %v1288
      %v1290 = vpop.f32.mrb[0].mxu0
      %v1291 = vpop.f32.mrb[0].mxu0
      %v1292 = vadd.f32 0.0, %v1291
      %v1293 = vpop.f32.mrb[0].mxu0
      %1294 = vmatprep.mubr.bf16.mxu0 0
      %1295 = vmatmul.mubr.bf16.gmra.mrb[0].mxu0 %v1238
      %v1296 = vpop.f32.mrb[0].mxu0
      %v1297 = vadd.f32 0.0, %v1296
      %v1298 = vpop.f32.mrb[0].mxu0
      %v1299 = vpop.f32.mrb[0].mxu0
      %v1300 = vadd.f32 0.0, %v1299
      %v1301 = vpop.f32.mrb[0].mxu0
      %1302 = vmatprep.mubr.bf16.mxu0 0
      %1303 = vmatmul.mubr.bf16.gmra.mrb[0].mxu0 %v1241
      %v1304 = vpop.f32.mrb[0].mxu0
      %v1305 = vadd.f32 0.0, %v1304
      %v1306 = vpop.f32.mrb[0].mxu0
      %v1307 = vpop.f32.mrb[0].mxu0
      %v1308 = vadd.f32 0.0, %v1307
      %v1309 = vpop.f32.mrb[0].mxu0
      %1310 = vdwg.mxu0
      %v1311 = vld [vmem:[#allocation5] sm:$0xff]
      %v1312 = vld [vmem:[#allocation5 + $0x8] sm:$0xff]
      %v1313 = vld [vmem:[#allocation5 + $0x10] sm:$0xff]
      %v1314 = vld [vmem:[#allocation5 + $0x18] sm:$0xff]
      %v1315 = vld [vmem:[#allocation5 + $0x20] sm:$0xff]
      %v1316 = vld [vmem:[#allocation5 + $0x28] sm:$0xff]
      %v1317 = vld [vmem:[#allocation5 + $0x30] sm:$0xff]
      %v1318 = vld [vmem:[#allocation5 + $0x38] sm:$0xff]
      %v1319 = vadd.f32 %v1311, %v1281
      %v1320 = vadd.f32 %v1312, %v1284
      %v1321 = vadd.f32 %v1313, %v1289
      %v1322 = vadd.f32 %v1314, %v1292
      %v1323 = vadd.f32 %v1315, %v1297
      %v1324 = vadd.f32 %v1316, %v1300
      %v1325 = vadd.f32 %v1317, %v1305
      %v1326 = vadd.f32 %v1318, %v1308
      %1327 = vst.msk [vmem:[#allocation5] sm:$0xff] %vm549, %v1319
      %1328 = vst.msk [vmem:[#allocation5 + $0x8] sm:$0xff] %vm549, %v1320
      %1329 = vst.msk [vmem:[#allocation5 + $0x10] sm:$0xff] %vm549, %v1321
      %1330 = vst.msk [vmem:[#allocation5 + $0x18] sm:$0xff] %vm549, %v1322
      %1331 = vst.msk [vmem:[#allocation5 + $0x20] sm:$0xff] %vm549, %v1323
      %1332 = vst.msk [vmem:[#allocation5 + $0x28] sm:$0xff] %vm549, %v1324
      %1333 = vst.msk [vmem:[#allocation5 + $0x30] sm:$0xff] %vm549, %v1325
      %1334 = vst.msk [vmem:[#allocation5 + $0x38] sm:$0xff] %vm549, %v1326
      %v1335 = vld [vmem:[#allocation5] sm:$0xff]
      %v1336 = vld [vmem:[#allocation5 + $0x8] sm:$0xff]
      %v1337 = vld [vmem:[#allocation5 + $0x10] sm:$0xff]
      %v1338 = vld [vmem:[#allocation5 + $0x18] sm:$0xff]
      %v1339 = vld [vmem:[#allocation5 + $0x20] sm:$0xff]
      %v1340 = vld [vmem:[#allocation5 + $0x28] sm:$0xff]
      %v1341 = vld [vmem:[#allocation5 + $0x30] sm:$0xff]
      %v1342 = vld [vmem:[#allocation5 + $0x38] sm:$0xff]
      %v1343 = vld [vmem:[%s5] sm:$0x1]
      %v1345 = vlaneseq
      %v1346 = vshrl.u32 %v1345, 7
      %v1347 = vsub.s32 0, %v1346
      %v1348 = vrot.slane %v1343, %v1347
      %v1350 = vmul.f32 %v1335, %v1348
      %v1351 = vmul.f32 %v1336, %v1348
      %v1352 = vmul.f32 %v1337, %v1348
      %v1353 = vmul.f32 %v1338, %v1348
      %v1354 = vmul.f32 %v1339, %v1348
      %v1355 = vmul.f32 %v1340, %v1348
      %v1356 = vmul.f32 %v1341, %v1348
      %v1357 = vmul.f32 %v1342, %v1348
      %v1358 = vld [vmem:[%s6] sm:$0x1]
      %v1360 = vlaneseq
      %v1361 = vshrl.u32 %v1360, 7
      %v1362 = vsub.s32 0, %v1361
      %v1363 = vrot.slane %v1358, %v1362
      %v1365 = vadd.f32 %v1350, %v1363
      %v1366 = vadd.f32 %v1351, %v1363
      %v1367 = vadd.f32 %v1352, %v1363
      %v1368 = vadd.f32 %v1353, %v1363
      %v1369 = vadd.f32 %v1354, %v1363
      %v1370 = vadd.f32 %v1355, %v1363
      %v1371 = vadd.f32 %v1356, %v1363
      %v1372 = vadd.f32 %v1357, %v1363
      %v1373 = vmax.f32 %v1365, 0.0
      %v1374 = vmax.f32 %v1366, 0.0
      %v1375 = vmax.f32 %v1367, 0.0
      %v1376 = vmax.f32 %v1368, 0.0
      %v1377 = vmax.f32 %v1369, 0.0
      %v1378 = vmax.f32 %v1370, 0.0
      %v1379 = vmax.f32 %v1371, 0.0
      %v1380 = vmax.f32 %v1372, 0.0
      %1381 = vst.msk [vmem:[%s278] sm:$0xff] %vm549, %v1373
      %1382 = vst.msk [vmem:[%s278 + $0x8] sm:$0xff] %vm549, %v1374
      %1383 = vst.msk [vmem:[%s278 + $0x10] sm:$0xff] %vm549, %v1375
      %1384 = vst.msk [vmem:[%s278 + $0x18] sm:$0xff] %vm549, %v1376
      %1385 = vst.msk [vmem:[%s278 + $0x20] sm:$0xff] %vm549, %v1377
      %1386 = vst.msk [vmem:[%s278 + $0x28] sm:$0xff] %vm549, %v1378
      %1387 = vst.msk [vmem:[%s278 + $0x30] sm:$0xff] %vm549, %v1379
      %1388 = vst.msk [vmem:[%s278 + $0x38] sm:$0xff] %vm549, %v1380
      %p1389 = scmp.lt.s32.totalorder %s18, 1
      %s1390 = scalar_select %p1389, %s18, 1
      %s1391 = smul.addr %s1390, 8
      %s1392 = smul.addr %s1391, 8
      %s1393 = scalar_lea.vmem %s7, %s1392
      // Predicated region
      $region49: #{tpu_custom_call.1} parent=47 // pred_check
        %p1394 = pneg %p188
      $region50: #{tpu_custom_call.1} parent=47 // pred_check_branch
        %1396 = sbr.rel (%p1394) target = $region52
      $region51: #{tpu_custom_call.1} parent=47 // pred_region
        _
      $region52: #{tpu_custom_call.1} parent=47 // pred_fallthru
        _
    $region48: #{tpu_custom_call.1} parent=5 // pred_fallthru
      _
    %p1397 = scmp.le.s32.totalorder 2, %s13
    // Predicated region
    $region53: #{tpu_custom_call.1} parent=5 // pred_check
      %p1398 = pneg %p1397
    $region54: #{tpu_custom_call.1} parent=5 // pred_check_branch
      %1400 = sbr.rel (%p1398) target = $region56
    $region55: #{tpu_custom_call.1} parent=5 // pred_region
      %s1401 = ssub.s32 %s13, 2
      // Predicated region
      $region57: #{tpu_custom_call.1} parent=55 // pred_check
        %p1402 = pneg %p194
      $region58: #{tpu_custom_call.1} parent=55 // pred_check_branch
        %1404 = sbr.rel (%p1402) target = $region60
      $region59: #{tpu_custom_call.1} parent=55 // pred_region
        %p1405 = scmp.lt.s32.totalorder %s19, 1
        %s1406 = scalar_select %p1405, %s19, 1
        %s1407 = smul.addr %s1406, 8
        %s1408 = smul.addr %s1407, 8
        %s1409 = scalar_lea.vmem %s7, %s1408
      $region60: #{tpu_custom_call.1} parent=55 // pred_fallthru
        _
    $region56: #{tpu_custom_call.1} parent=5 // pred_fallthru
      _
  $region6: #{tpu_custom_call.1} parent=0 // loop_footer
    %s17 = sadd.s32 1, %s13
  $region7: #{tpu_custom_call.1} parent=0 // loop_footer_branch
    %12 = sbr.rel target = $region3
  $region8: #{tpu_custom_call.1} parent=0 // loop_exit
    _

</llo_original>
